<compile_context>
chip_gen: v7x
topology: tpu7x:2x2x1
jax: 0.10.0
libtpu: 0.0.40
codegen_flags: <defaults>
</compile_context>

<pallas_src>
from functools import partial

import numpy as np
import jax
import jax.numpy as jnp
from jax.experimental import pallas as pl
from jax.experimental.pallas import tpu as pltpu


# ----------------------------------------------------------------------------
# Helpers
# ----------------------------------------------------------------------------
def _sublane_align(dtype) -> int:
    """Minimum sublane multiple for a dtype (8 f32, 16 bf16, 32 int8/fp8)."""
    itemsize = jnp.dtype(dtype).itemsize
    return max(8, 32 // max(itemsize, 1))


def _tile(n: int, preferred: int, align: int) -> int:
    """Largest divisor of n that is <= preferred and a multiple of align, else n."""
    t = min(preferred, n)
    t -= t % align
    while t >= align:
        if n % t == 0:
            return t
        t -= align
    return n


def get_local_mask(num_q: int, num_k: int) -> np.ndarray:
    """Same as Attention.get_local_mask (True = masked / disallowed)."""
    keys_per_query = num_k // num_q
    extra_keys = num_k % num_q
    mask = np.ones((num_q, num_k), dtype=bool)
    start = 0
    for i in range(num_q):
        end = start + keys_per_query + (1 if i < extra_keys else 0)
        mask[i, start:end] = False
        start = end
    return mask


# ----------------------------------------------------------------------------
# Tiled linear projection kernel:  out = x @ W + b   (f32 accumulation)
# ----------------------------------------------------------------------------
def _linear_kernel(x_ref, w_ref, b_ref, o_ref, acc_ref):
    @pl.when(pl.program_id(2) == 0)
    def _():
        acc_ref[...] = jnp.zeros_like(acc_ref)

    acc_ref[...] += jnp.dot(x_ref[...], w_ref[...],
                            preferred_element_type=jnp.float32)

    @pl.when(pl.program_id(2) == pl.num_programs(2) - 1)
    def _():
        o_ref[...] = (acc_ref[...] + b_ref[...].astype(jnp.float32)).astype(o_ref.dtype)


def _linear(x, w, b, out_dtype=None):
    """x: [..., Din] @ w: [Din, Dout] + b: [1, Dout] -> [..., Dout]."""
    out_dtype = x.dtype if out_dtype is None else out_dtype
    orig_shape = x.shape
    Din = orig_shape[-1]
    Dout = w.shape[1]
    R = int(np.prod(orig_shape[:-1]))
    x2 = x.reshape(R, Din)

    # Larger tiles toward the HBM-roofline regime; dtype-aware sublane alignment.
    tr = _tile(R, 512, _sublane_align(x.dtype))
    tn = _tile(Dout, 512, 128)
    tk = _tile(Din, 512, 128)

    out = pl.pallas_call(
        _linear_kernel,
        out_shape=jax.ShapeDtypeStruct((R, Dout), out_dtype),
        grid_spec=pltpu.PrefetchScalarGridSpec(
            num_scalar_prefetch=0,
            grid=(R // tr, Dout // tn, Din // tk),
            in_specs=[
                pl.BlockSpec((tr, tk), lambda i, j, k: (i, k)),
                pl.BlockSpec((tk, tn), lambda i, j, k: (k, j)),
                pl.BlockSpec((1, tn), lambda i, j, k: (0, j)),
            ],
            out_specs=pl.BlockSpec((tr, tn), lambda i, j, k: (i, j)),
            scratch_shapes=[pltpu.VMEM((tr, tn), jnp.float32)],
        ),
        compiler_params=pltpu.CompilerParams(
            dimension_semantics=("parallel", "parallel", "arbitrary")),
    )(x2, w, b)
    return out.reshape(*orig_shape[:-1], Dout)


# ----------------------------------------------------------------------------
# Flash-style local attention kernel (online softmax, band-skipping k-tiles)
# ----------------------------------------------------------------------------
def _flash_kernel(kt_idx_ref, kt_count_ref,       # scalar-prefetch (SMEM, 1D)
                  q_ref, k_ref, v_ref, o_ref,     # VMEM tiles
                  m_sc, l_sc, acc_sc,             # scratch
                  *, tq, tk, kpq, extra, max_kt):
    qi = pl.program_id(2)
    ki = pl.program_id(3)

    @pl.when(ki == 0)
    def _init():
        m_sc[...] = jnp.full_like(m_sc, -jnp.inf)
        l_sc[...] = jnp.zeros_like(l_sc)
        acc_sc[...] = jnp.zeros_like(acc_sc)

    @pl.when(ki < kt_count_ref[qi])
    def _step():
        # (tq, hd) x (tk, hd)^T -> (tq, tk); bf16 operands take the fast MXU path,
        # accumulation stays f32.
        s = jax.lax.dot_general(q_ref[...], k_ref[...],
                                (((1,), (1,)), ((), ())),
                                preferred_element_type=jnp.float32)

        # Local band mask generated in-kernel (no [Sq,Sk] HBM mask traffic).
        row = qi * tq + jax.lax.broadcasted_iota(jnp.int32, (tq, tk), 0)
        col = (kt_idx_ref[qi * max_kt + ki] * tk
               + jax.lax.broadcasted_iota(jnp.int32, (tq, tk), 1))
        start = row * kpq + jnp.minimum(row, extra)
        end = start + kpq + jnp.where(row < extra, 1, 0)
        in_band = (col >= start) & (col < end)
        s = jnp.where(in_band, s, jnp.float32(-1e30))

        m_prev = m_sc[...]
        m_new = jnp.maximum(m_prev, jnp.max(s, axis=-1, keepdims=True))
        alpha = jnp.exp(m_prev - m_new)
        # Explicitly zero out-of-band probabilities (review): no reliance on
        # exp(-1e30 - m) underflow or on a later tile's alpha rescale.
        p = jnp.where(in_band, jnp.exp(s - m_new), jnp.float32(0.0))
        l_sc[...] = alpha * l_sc[...] + jnp.sum(p, axis=-1, keepdims=True)
        acc_sc[...] = alpha * acc_sc[...] + jnp.dot(
            p.astype(v_ref.dtype), v_ref[...], preferred_element_type=jnp.float32)
        m_sc[...] = m_new

    @pl.when(ki == pl.num_programs(3) - 1)
    def _finalize():
        o_ref[...] = (acc_sc[...] *
                      pl.reciprocal(l_sc[...], approx=True)).astype(o_ref.dtype)


def _local_flash_attention(q_arr, k_arr, v_arr, q_base, k_base, v_base,
                           Sq, Sk, num_heads, head_dim, out_dtype,
                           tq_pref=128, tk_pref=128):
    """q_arr/k_arr/v_arr are [B, S, *] arrays whose columns hold H head blocks of width
    head_dim starting at head-block offsets q_base/k_base/v_base (they may alias).
    tq_pref/tk_pref: 128 fills the v5e MXU; 256 can be used on v6e/v7x for wide bands."""
    B = q_arr.shape[0]
    D = num_heads * head_dim
    align = _sublane_align(q_arr.dtype)
    tq = _tile(Sq, tq_pref, align)
    tk = _tile(Sk, tk_pref, align)
    nq = Sq // tq
    nk = Sk // tk
    kpq = Sk // Sq
    extra = Sk % Sq

    # Host-side (static) band -> per-q-tile table of intersecting k-tile block indices.
    kt_start = np.zeros((nq,), np.int32)
    kt_count = np.zeros((nq,), np.int32)
    for qi in range(nq):
        r0, r1 = qi * tq, (qi + 1) * tq - 1
        s0 = r0 * kpq + min(r0, extra)
        e1 = r1 * kpq + min(r1, extra) + kpq + (1 if r1 < extra else 0)
        ks = min(s0 // tk, nk - 1)
        ke = min(-(-max(e1, s0 + 1) // tk), nk)
        kt_start[qi] = ks
        kt_count[qi] = max(1, ke - ks)
    max_kt = int(kt_count.max())
    # Flattened 1D table: 2D SMEM arrays pad the last dim to 128 words (review item).
    kt_idx = np.zeros((nq * max_kt,), np.int32)
    for qi in range(nq):
        for j in range(max_kt):
            kt_idx[qi * max_kt + j] = kt_start[qi] + min(j, int(kt_count[qi]) - 1)

    kernel = partial(_flash_kernel, tq=tq, tk=tk, kpq=kpq, extra=extra, max_kt=max_kt)

    def _q_map(b, h, qi, ki, kt_idx_r, kt_count_r):
        return (b, qi, q_base + h)

    def _kv_map(base):
        def m(b, h, qi, ki, kt_idx_r, kt_count_r):
            return (b, kt_idx_r[qi * max_kt + ki], base + h)
        return m

    def _o_map(b, h, qi, ki, kt_idx_r, kt_count_r):
        return (b, qi, h)

    return pl.pallas_call(
        kernel,
        out_shape=jax.ShapeDtypeStruct((B, Sq, D), out_dtype),
        grid_spec=pltpu.PrefetchScalarGridSpec(
            num_scalar_prefetch=2,
            grid=(B, num_heads, nq, max_kt),
            in_specs=[
                pl.BlockSpec((None, tq, head_dim), _q_map),
                pl.BlockSpec((None, tk, head_dim), _kv_map(k_base)),
                pl.BlockSpec((None, tk, head_dim), _kv_map(v_base)),
            ],
            out_specs=pl.BlockSpec((None, tq, head_dim), _o_map),
            scratch_shapes=[
                pltpu.VMEM((tq, 1), jnp.float32),          # running max m
                pltpu.VMEM((tq, 1), jnp.float32),          # running denom l
                pltpu.VMEM((tq, head_dim), jnp.float32),   # running numerator acc
            ],
        ),
        compiler_params=pltpu.CompilerParams(
            dimension_semantics=("parallel", "parallel", "parallel", "arbitrary")),
    )(jnp.asarray(kt_idx), jnp.asarray(kt_count), q_arr, k_arr, v_arr)


# ----------------------------------------------------------------------------
# Full forward pass (matches Attention.forward, use_flash=False, local=True)
# ----------------------------------------------------------------------------
def attention_forward(x, c, params, num_heads, compute_dtype=jnp.bfloat16):
    """compute_dtype: dtype used for all MXU matmuls (default bf16 — the fast MXU path on
    v5e/v6e, and the only MXU path on v7x).  Pass jnp.float32 for bit-closer results."""
    wq, bq, wk, bk, wv, bv, wo, bo = params
    B, Sq, D = x.shape
    assert D % num_heads == 0
    head_dim = D // num_heads
    out_dtype = x.dtype
    cd = x.dtype if compute_dtype is None else jnp.dtype(compute_dtype)

    if c is None:
        c = x
    Sk = c.shape[1]

    xc = x.astype(cd)
    cc = xc if c is x else c.astype(cd)

    # ---- Fast path (review): when Sk == Sq the local mask gives each query exactly one
    # key (its own index); softmax over a single key is 1, so attention output == V.
    # Skip Q/K projections and the attention kernel entirely: out = (c Wv + bv) Wo + bo.
    if Sk == Sq:
        v = _linear(cc, wv.astype(cd), bv.astype(cd))
        return _linear(v, wo.astype(cd), bo.astype(cd), out_dtype=out_dtype)

    # ---- General banded path (cross-attention with Sk != Sq).
    # Head slicing / concat is done by BlockSpec DMA on head_dim-wide column blocks,
    # which requires lane-dense (multiple-of-128) head tiles.
    assert head_dim % 128 == 0, "this kernel requires head_dim % 128 == 0"
    scale = head_dim ** -0.5

    # Fold the 1/sqrt(hd) scale into the Q projection (removes it from the hot loop).
    wq_s = (wq * scale).astype(cd)
    bq_s = (bq * scale).astype(cd)

    q_arr = _linear(xc, wq_s, bq_s)                           # [B, Sq, D]
    w_kv = jnp.concatenate([wk, wv], axis=1).astype(cd)       # fused K/V projection
    b_kv = jnp.concatenate([bk, bv], axis=1).astype(cd)
    kv = _linear(cc, w_kv, b_kv)                              # [B, Sk, 2D]
    k_arr = v_arr = kv
    q_base, k_base, v_base = 0, 0, num_heads

    attn = _local_flash_attention(q_arr, k_arr, v_arr, q_base, k_base, v_base,
                                  Sq, Sk, num_heads, head_dim, cd)
    # TODO(synk): attn/proj dropout are training-mode no-ops and are not implemented.
    return _linear(attn, wo.astype(cd), bo.astype(cd), out_dtype=out_dtype)


# ----------------------------------------------------------------------------
# Pure-JAX reference (mirrors nn.MultiheadAttention with bool attn_mask)
# ----------------------------------------------------------------------------
def attention_reference(x, c, params, num_heads):
    wq, bq, wk, bk, wv, bv, wo, bo = params
    if c is None:
        c = x
    B, Sq, D = x.shape
    Sk = c.shape[1]
    hd = D // num_heads
    q = (x @ wq + bq).reshape(B, Sq, num_heads, hd).transpose(0, 2, 1, 3)
    k = (c @ wk + bk).reshape(B, Sk, num_heads, hd).transpose(0, 2, 1, 3)
    v = (c @ wv + bv).reshape(B, Sk, num_heads, hd).transpose(0, 2, 1, 3)
    s = (q @ jnp.swapaxes(k, -1, -2)) * (hd ** -0.5)
    mask = jnp.asarray(get_local_mask(Sq, Sk))
    s = jnp.where(mask, -jnp.inf, s)
    p = jax.nn.softmax(s, axis=-1)
    o = (p @ v).transpose(0, 2, 1, 3).reshape(B, Sq, D)
    return o @ wo + bo


if __name__ == "__main__":
    # Small shapes consistent with the module: dim divisible by num_heads,
    # head_dim = 128 (lane-dense head tiles).
    D, H = 256, 2
    init = 0.05

    key = jax.random.PRNGKey(0)
    ks = jax.random.split(key, 12)
    wq = jax.random.normal(ks[0], (D, D), jnp.float32) * init
    wk = jax.random.normal(ks[1], (D, D), jnp.float32) * init
    wv = jax.random.normal(ks[2], (D, D), jnp.float32) * init
    wo = jax.random.normal(ks[3], (D, D), jnp.float32) * init
    bq = jax.random.normal(ks[4], (1, D), jnp.float32) * init
    bk = jax.random.normal(ks[5], (1, D), jnp.float32) * init
    bv = jax.random.normal(ks[6], (1, D), jnp.float32) * init
    bo = jax.random.normal(ks[7], (1, D), jnp.float32) * init
    params = (wq, bq, wk, bk, wv, bv, wo, bo)

    def check(name, x, c, compute_dtype, tol):
        out = jax.block_until_ready(
            attention_forward(x, c, params, H, compute_dtype=compute_dtype))
        ref = attention_reference(x, c, params, H)
        assert out.shape == ref.shape, (name, out.shape, ref.shape)
        err = float(jnp.max(jnp.abs(out.astype(jnp.float32) - ref)))
        assert err < tol, f"{name}: max abs error {err}"

    # 1) Self-attention (c is None -> c = x), Sq == Sk: identity-gather fast path.
    x1 = jax.random.normal(ks[8], (2, 256, D), jnp.float32)
    check("self f32", x1, None, jnp.float32, 2e-2)     # exactness check
    check("self bf16", x1, None, jnp.bfloat16, 1e-1)   # default bf16 MXU path

    # 2) Cross-attention, Sk > Sq with a remainder (exercises band math + in-kernel mask).
    x2 = jax.random.normal(ks[9], (2, 128, D), jnp.float32)
    c2 = jax.random.normal(ks[10], (2, 192, D), jnp.float32)
    check("cross f32 remainder", x2, c2, jnp.float32, 2e-2)

    # 3) Cross-attention, wide band (4 keys/query), default bf16 flash path.
    c3 = jax.random.normal(ks[11], (2, 512, D), jnp.float32)
    check("cross bf16 wide", x2, c3, jnp.bfloat16, 1e-1)

    print("KERNEL_OK")
</pallas_src>

<mosaic_0001>
module attributes {stable_mosaic.version = 11 : i64} {
  func.func @_linear_kernel(%arg0: i32, %arg1: i32, %arg2: i32, %arg3: memref<512x256xf32, #tpu.memory_space<vmem>>, %arg4: memref<256x256xf32, #tpu.memory_space<vmem>>, %arg5: memref<1x256xf32, #tpu.memory_space<vmem>>, %arg6: memref<512x256xf32, #tpu.memory_space<vmem>>, %arg7: memref<512x256xf32, #tpu.memory_space<vmem>>) attributes {dimension_semantics = [#tpu.dimension_semantics<parallel>, #tpu.dimension_semantics<parallel>, #tpu.dimension_semantics<arbitrary>], iteration_bounds = array<i64: 1, 1, 1>, scalar_prefetch = 0 : i64, scratch_operands = 1 : i64, tpu.core_type = #tpu.core_type<tc>, window_params = [{transform_indices = @transform_0, window_bounds = array<i64: 512, 256>}, {transform_indices = @transform_1, window_bounds = array<i64: 256, 256>}, {transform_indices = @transform_2, window_bounds = array<i64: 1, 256>}, {transform_indices = @transform_3, window_bounds = array<i64: 512, 256>}]} {
    %c0_i32 = arith.constant 0 : i32
    %0 = arith.cmpi eq, %arg2, %c0_i32 : i32
    %1 = arith.extui %0 : i1 to i32
    %c0_i32_0 = arith.constant 0 : i32
    %2 = arith.cmpi ne, %1, %c0_i32_0 : i32
    scf.if %2 {
      %cst_10 = arith.constant 0.000000e+00 : f32
      %12 = vector.broadcast %cst_10 : f32 to vector<512x256xf32>
      %c0_11 = arith.constant 0 : index
      %c0_12 = arith.constant 0 : index
      %13 = vector.load %arg7[%c0_11, %c0_12] : memref<512x256xf32, #tpu.memory_space<vmem>>, vector<512x256xf32>
      tpu.vector_store %arg7[%c0_11, %c0_12], %12 {strides = array<i32>} : memref<512x256xf32, #tpu.memory_space<vmem>>, vector<512x256xf32>,
    } else {
    }
    %c0 = arith.constant 0 : index
    %c0_1 = arith.constant 0 : index
    %3 = vector.load %arg7[%c0, %c0_1] : memref<512x256xf32, #tpu.memory_space<vmem>>, vector<512x256xf32>
    %c0_2 = arith.constant 0 : index
    %c0_3 = arith.constant 0 : index
    %4 = vector.load %arg3[%c0_2, %c0_3] : memref<512x256xf32, #tpu.memory_space<vmem>>, vector<512x256xf32>
    %c0_4 = arith.constant 0 : index
    %c0_5 = arith.constant 0 : index
    %5 = vector.load %arg4[%c0_4, %c0_5] : memref<256x256xf32, #tpu.memory_space<vmem>>, vector<256x256xf32>
    %cst = arith.constant dense<0.000000e+00> : vector<512x256xf32>
    %6 = tpu.matmul %4, %5, %cst {dimension_numbers = #tpu.dot_dimension_numbers<[1], [0], [0], [1], [0, 0, 1, 1], [], []>} : vector<512x256xf32>, vector<256x256xf32>, vector<512x256xf32> -> vector<512x256xf32>
    %7 = arith.addf %3, %6 : vector<512x256xf32>
    %c0_6 = arith.constant 0 : index
    %c0_7 = arith.constant 0 : index
    %8 = vector.load %arg7[%c0_6, %c0_7] : memref<512x256xf32, #tpu.memory_space<vmem>>, vector<512x256xf32>
    tpu.vector_store %arg7[%c0_6, %c0_7], %7 {strides = array<i32>} : memref<512x256xf32, #tpu.memory_space<vmem>>, vector<512x256xf32>,
    %c0_i32_8 = arith.constant 0 : i32
    %9 = arith.cmpi eq, %arg2, %c0_i32_8 : i32
    %10 = arith.extui %9 : i1 to i32
    %c0_i32_9 = arith.constant 0 : i32
    %11 = arith.cmpi ne, %10, %c0_i32_9 : i32
    scf.if %11 {
      %c0_10 = arith.constant 0 : index
      %c0_11 = arith.constant 0 : index
      %12 = vector.load %arg7[%c0_10, %c0_11] : memref<512x256xf32, #tpu.memory_space<vmem>>, vector<512x256xf32>
      %c0_12 = arith.constant 0 : index
      %c0_13 = arith.constant 0 : index
      %13 = vector.load %arg5[%c0_12, %c0_13] : memref<1x256xf32, #tpu.memory_space<vmem>>, vector<1x256xf32>
      %14 = vector.broadcast %13 : vector<1x256xf32> to vector<512x256xf32>
      %15 = arith.addf %12, %14 : vector<512x256xf32>
      %c0_14 = arith.constant 0 : index
      %c0_15 = arith.constant 0 : index
      %16 = vector.load %arg6[%c0_14, %c0_15] : memref<512x256xf32, #tpu.memory_space<vmem>>, vector<512x256xf32>
      tpu.vector_store %arg6[%c0_14, %c0_15], %15 {strides = array<i32>} : memref<512x256xf32, #tpu.memory_space<vmem>>, vector<512x256xf32>,
    } else {
    }
    return
  }
  func.func @transform_0(%arg0: i32, %arg1: i32, %arg2: i32) -> (i32, i32) {
    %c0_i32 = arith.constant 0 : i32
    return %arg0, %arg2 : i32, i32
  }
  func.func @transform_1(%arg0: i32, %arg1: i32, %arg2: i32) -> (i32, i32) {
    %c0_i32 = arith.constant 0 : i32
    return %arg2, %arg1 : i32, i32
  }
  func.func @transform_2(%arg0: i32, %arg1: i32, %arg2: i32) -> (i32, i32) {
    %c0_i32 = arith.constant 0 : i32
    %c0_i32_0 = arith.constant 0 : i32
    return %c0_i32, %arg1 : i32, i32
  }
  func.func @transform_3(%arg0: i32, %arg1: i32, %arg2: i32) -> (i32, i32) {
    %c0_i32 = arith.constant 0 : i32
    return %arg0, %arg1 : i32, i32
  }
}

</mosaic_0001>

<llo_original>
// kernel: tpu_custom_call.1
$region0: #{tpu_custom_call.1}
  #allocation0 [shape = 'u32[]', space=smem, size = 0x4, offset = 0x4, fixed_abs, tag = 'smem constant byte address 0x4 - core index']
  #allocation1 [shape = 'u32[144,128]{1,0:T(1,128)}', space=vmem, size = 0x12000, scoped, tag = 'internal scratch']
  #allocation2 [shape = 'f32[512,256]{1,0:T(8,128)}', space=vmem, size = 0x80000, scoped, tag = 'scratch operand']
  %s0 = inlined_call_operand.hbm [shape: f32[512,256], index: 0, kind: input, shape index: {}]
  %s1 = inlined_call_operand.hbm [shape: f32[256,256], index: 1, kind: input, shape index: {}]
  %s2 = inlined_call_operand.vmem [shape: f32[1,256], index: 2, kind: input, shape index: {}]
  %s3 = inlined_call_operand.hbm [shape: f32[512,256], index: 3, kind: output, shape index: {}]
  %s4 = sld [smem:[#allocation0]]
  $region38: #{tpu_custom_call.1} parent=0
    _
  %s6 = ssub.s32 1, %s4
  %s7 = scalar_select 0, %s6, %s4
  $region1: #{tpu_custom_call.1} parent=0
    #allocation3 [shape = 'u8[524288]{0}', space=vmem, size = 0x80000, scoped, tag = 'input window, operand 0, single buffered']
    #allocation4 [shape = 's32[1]{0}', space=sflag, size = 0x4, scoped, tag = 'scoped memory for tpu_custom_call.1']
    #allocation5 [shape = 's32[1]{0}', space=sflag, size = 0x4, scoped, tag = 'scoped memory for tpu_custom_call.1']
    #allocation6 [shape = 'u8[262144]{0}', space=vmem, size = 0x40000, scoped, tag = 'input window, operand 1, single buffered']
    #allocation7 [shape = 's32[1]{0}', space=sflag, size = 0x4, scoped, tag = 'scoped memory for tpu_custom_call.1']
    #allocation8 [shape = 'u8[524288]{0}', space=vmem, size = 0x80000, scoped, tag = 'output window, operand 0, single buffered']
    %8 = vsyncpa [#allocation4], 0
    %9 = vsyncpa [#allocation7], 0
    %10 = vsyncpa [#allocation5], 0
    // Predicated region
    $region2: #{tpu_custom_call.1} parent=1 // pred_check
      _
    $region3: #{tpu_custom_call.1} parent=1 // pred_check_branch
      %12 = sbr.rel (0) target = $region5
    $region4: #{tpu_custom_call.1} parent=1 // pred_region
      %s14 = ssub.s32 16384, 16384
      %15 = vsyncadd [#allocation4], %s14
      %s16 = sshll.u32 [#allocation3], 4
      %s17 = int_to_ptr.vmem [resolvable:$true] %s16
      %22 = dma.hbm_to_vmem [thread:$0]  %s0, 16384, %s17, [#allocation4], 256, 256, 16
    $region5: #{tpu_custom_call.1} parent=1 // pred_fallthru
      _
    // Predicated region
    $region6: #{tpu_custom_call.1} parent=1 // pred_check
      _
    $region7: #{tpu_custom_call.1} parent=1 // pred_check_branch
      %24 = sbr.rel (0) target = $region9
    $region8: #{tpu_custom_call.1} parent=1 // pred_region
      %s26 = ssub.s32 8192, 8192
      %27 = vsyncadd [#allocation7], %s26
      %s28 = sshll.u32 [#allocation6], 4
      %s29 = int_to_ptr.vmem [resolvable:$true] %s28
      %34 = dma.hbm_to_vmem [thread:$0]  %s1, 8192, %s29, [#allocation7], 256, 256, 16
    $region9: #{tpu_custom_call.1} parent=1 // pred_fallthru
      _
    // Predicated region
    $region10: #{tpu_custom_call.1} parent=1 // pred_check
      _
    $region11: #{tpu_custom_call.1} parent=1 // pred_check_branch
      %36 = sbr.rel (0) target = $region13
    $region12: #{tpu_custom_call.1} parent=1 // pred_region
      _
    $region13: #{tpu_custom_call.1} parent=1 // pred_fallthru
      _
    // Predicated region
    $region14: #{tpu_custom_call.1} parent=1 // pred_check
      _
    $region15: #{tpu_custom_call.1} parent=1 // pred_check_branch
      %38 = sbr.rel (0) target = $region17
    $region16: #{tpu_custom_call.1} parent=1 // pred_region
      %39 = dma.done [#allocation4], 16384
    $region17: #{tpu_custom_call.1} parent=1 // pred_fallthru
      _
    // Predicated region
    $region18: #{tpu_custom_call.1} parent=1 // pred_check
      _
    $region19: #{tpu_custom_call.1} parent=1 // pred_check_branch
      %41 = sbr.rel (0) target = $region21
    $region20: #{tpu_custom_call.1} parent=1 // pred_region
      %42 = dma.done [#allocation7], 8192
    $region21: #{tpu_custom_call.1} parent=1 // pred_fallthru
      _
    %p43 = scmp.eq.s32.totalorder 0, 0
    // Predicated region
    $region22: #{tpu_custom_call.1} parent=1 // pred_check
      %p44 = pneg %p43
    $region23: #{tpu_custom_call.1} parent=1 // pred_check_branch
      %46 = sbr.rel (%p44) target = $region25
    $region24: #{tpu_custom_call.1} parent=1 // pred_region
      %47 = vst [vmem:[#allocation2] sm:$0xff] 0.0
      %48 = vst [vmem:[#allocation2 + $0x8] sm:$0xff] 0.0
      %49 = vst [vmem:[#allocation2 + $0x10] sm:$0xff] 0.0
      %50 = vst [vmem:[#allocation2 + $0x18] sm:$0xff] 0.0
      %51 = vst [vmem:[#allocation2 + $0x20] sm:$0xff] 0.0
      %52 = vst [vmem:[#allocation2 + $0x28] sm:$0xff] 0.0
      %53 = vst [vmem:[#allocation2 + $0x30] sm:$0xff] 0.0
      %54 = vst [vmem:[#allocation2 + $0x38] sm:$0xff] 0.0
      %55 = vst [vmem:[#allocation2 + $0x40] sm:$0xff] 0.0
      %56 = vst [vmem:[#allocation2 + $0x48] sm:$0xff] 0.0
      %57 = vst [vmem:[#allocation2 + $0x50] sm:$0xff] 0.0
      %58 = vst [vmem:[#allocation2 + $0x58] sm:$0xff] 0.0
      %59 = vst [vmem:[#allocation2 + $0x60] sm:$0xff] 0.0
      %60 = vst [vmem:[#allocation2 + $0x68] sm:$0xff] 0.0
      %61 = vst [vmem:[#allocation2 + $0x70] sm:$0xff] 0.0
      %62 = vst [vmem:[#allocation2 + $0x78] sm:$0xff] 0.0
      %63 = vst [vmem:[#allocation2 + $0x80] sm:$0xff] 0.0
      %64 = vst [vmem:[#allocation2 + $0x88] sm:$0xff] 0.0
      %65 = vst [vmem:[#allocation2 + $0x90] sm:$0xff] 0.0
      %66 = vst [vmem:[#allocation2 + $0x98] sm:$0xff] 0.0
      %67 = vst [vmem:[#allocation2 + $0xa0] sm:$0xff] 0.0
      %68 = vst [vmem:[#allocation2 + $0xa8] sm:$0xff] 0.0
      %69 = vst [vmem:[#allocation2 + $0xb0] sm:$0xff] 0.0
      %70 = vst [vmem:[#allocation2 + $0xb8] sm:$0xff] 0.0
      %71 = vst [vmem:[#allocation2 + $0xc0] sm:$0xff] 0.0
      %72 = vst [vmem:[#allocation2 + $0xc8] sm:$0xff] 0.0
      %73 = vst [vmem:[#allocation2 + $0xd0] sm:$0xff] 0.0
      %74 = vst [vmem:[#allocation2 + $0xd8] sm:$0xff] 0.0
      %75 = vst [vmem:[#allocation2 + $0xe0] sm:$0xff] 0.0
      %76 = vst [vmem:[#allocation2 + $0xe8] sm:$0xff] 0.0
      %77 = vst [vmem:[#allocation2 + $0xf0] sm:$0xff] 0.0
      %78 = vst [vmem:[#allocation2 + $0xf8] sm:$0xff] 0.0
      %79 = vst [vmem:[#allocation2 + $0x100] sm:$0xff] 0.0
      %80 = vst [vmem:[#allocation2 + $0x108] sm:$0xff] 0.0
      %81 = vst [vmem:[#allocation2 + $0x110] sm:$0xff] 0.0
      %82 = vst [vmem:[#allocation2 + $0x118] sm:$0xff] 0.0
      %83 = vst [vmem:[#allocation2 + $0x120] sm:$0xff] 0.0
      %84 = vst [vmem:[#allocation2 + $0x128] sm:$0xff] 0.0
      %85 = vst [vmem:[#allocation2 + $0x130] sm:$0xff] 0.0
      %86 = vst [vmem:[#allocation2 + $0x138] sm:$0xff] 0.0
      %87 = vst [vmem:[#allocation2 + $0x140] sm:$0xff] 0.0
      %88 = vst [vmem:[#allocation2 + $0x148] sm:$0xff] 0.0
      %89 = vst [vmem:[#allocation2 + $0x150] sm:$0xff] 0.0
      %90 = vst [vmem:[#allocation2 + $0x158] sm:$0xff] 0.0
      %91 = vst [vmem:[#allocation2 + $0x160] sm:$0xff] 0.0
      %92 = vst [vmem:[#allocation2 + $0x168] sm:$0xff] 0.0
      %93 = vst [vmem:[#allocation2 + $0x170] sm:$0xff] 0.0
      %94 = vst [vmem:[#allocation2 + $0x178] sm:$0xff] 0.0
      %95 = vst [vmem:[#allocation2 + $0x180] sm:$0xff] 0.0
      %96 = vst [vmem:[#allocation2 + $0x188] sm:$0xff] 0.0
      %97 = vst [vmem:[#allocation2 + $0x190] sm:$0xff] 0.0
      %98 = vst [vmem:[#allocation2 + $0x198] sm:$0xff] 0.0
      %99 = vst [vmem:[#allocation2 + $0x1a0] sm:$0xff] 0.0
      %100 = vst [vmem:[#allocation2 + $0x1a8] sm:$0xff] 0.0
      %101 = vst [vmem:[#allocation2 + $0x1b0] sm:$0xff] 0.0
      %102 = vst [vmem:[#allocation2 + $0x1b8] sm:$0xff] 0.0
      %103 = vst [vmem:[#allocation2 + $0x1c0] sm:$0xff] 0.0
      %104 = vst [vmem:[#allocation2 + $0x1c8] sm:$0xff] 0.0
      %105 = vst [vmem:[#allocation2 + $0x1d0] sm:$0xff] 0.0
      %106 = vst [vmem:[#allocation2 + $0x1d8] sm:$0xff] 0.0
      %107 = vst [vmem:[#allocation2 + $0x1e0] sm:$0xff] 0.0
      %108 = vst [vmem:[#allocation2 + $0x1e8] sm:$0xff] 0.0
      %109 = vst [vmem:[#allocation2 + $0x1f0] sm:$0xff] 0.0
      %110 = vst [vmem:[#allocation2 + $0x1f8] sm:$0xff] 0.0
      %111 = vst [vmem:[#allocation2 + $0x200] sm:$0xff] 0.0
      %112 = vst [vmem:[#allocation2 + $0x208] sm:$0xff] 0.0
      %113 = vst [vmem:[#allocation2 + $0x210] sm:$0xff] 0.0
      %114 = vst [vmem:[#allocation2 + $0x218] sm:$0xff] 0.0
      %115 = vst [vmem:[#allocation2 + $0x220] sm:$0xff] 0.0
      %116 = vst [vmem:[#allocation2 + $0x228] sm:$0xff] 0.0
      %117 = vst [vmem:[#allocation2 + $0x230] sm:$0xff] 0.0
      %118 = vst [vmem:[#allocation2 + $0x238] sm:$0xff] 0.0
      %119 = vst [vmem:[#allocation2 + $0x240] sm:$0xff] 0.0
      %120 = vst [vmem:[#allocation2 + $0x248] sm:$0xff] 0.0
      %121 = vst [vmem:[#allocation2 + $0x250] sm:$0xff] 0.0
      %122 = vst [vmem:[#allocation2 + $0x258] sm:$0xff] 0.0
      %123 = vst [vmem:[#allocation2 + $0x260] sm:$0xff] 0.0
      %124 = vst [vmem:[#allocation2 + $0x268] sm:$0xff] 0.0
      %125 = vst [vmem:[#allocation2 + $0x270] sm:$0xff] 0.0
      %126 = vst [vmem:[#allocation2 + $0x278] sm:$0xff] 0.0
      %127 = vst [vmem:[#allocation2 + $0x280] sm:$0xff] 0.0
      %128 = vst [vmem:[#allocation2 + $0x288] sm:$0xff] 0.0
      %129 = vst [vmem:[#allocation2 + $0x290] sm:$0xff] 0.0
      %130 = vst [vmem:[#allocation2 + $0x298] sm:$0xff] 0.0
      %131 = vst [vmem:[#allocation2 + $0x2a0] sm:$0xff] 0.0
      %132 = vst [vmem:[#allocation2 + $0x2a8] sm:$0xff] 0.0
      %133 = vst [vmem:[#allocation2 + $0x2b0] sm:$0xff] 0.0
      %134 = vst [vmem:[#allocation2 + $0x2b8] sm:$0xff] 0.0
      %135 = vst [vmem:[#allocation2 + $0x2c0] sm:$0xff] 0.0
      %136 = vst [vmem:[#allocation2 + $0x2c8] sm:$0xff] 0.0
      %137 = vst [vmem:[#allocation2 + $0x2d0] sm:$0xff] 0.0
      %138 = vst [vmem:[#allocation2 + $0x2d8] sm:$0xff] 0.0
      %139 = vst [vmem:[#allocation2 + $0x2e0] sm:$0xff] 0.0
      %140 = vst [vmem:[#allocation2 + $0x2e8] sm:$0xff] 0.0
      %141 = vst [vmem:[#allocation2 + $0x2f0] sm:$0xff] 0.0
      %142 = vst [vmem:[#allocation2 + $0x2f8] sm:$0xff] 0.0
      %143 = vst [vmem:[#allocation2 + $0x300] sm:$0xff] 0.0
      %144 = vst [vmem:[#allocation2 + $0x308] sm:$0xff] 0.0
      %145 = vst [vmem:[#allocation2 + $0x310] sm:$0xff] 0.0
      %146 = vst [vmem:[#allocation2 + $0x318] sm:$0xff] 0.0
      %147 = vst [vmem:[#allocation2 + $0x320] sm:$0xff] 0.0
      %148 = vst [vmem:[#allocation2 + $0x328] sm:$0xff] 0.0
      %149 = vst [vmem:[#allocation2 + $0x330] sm:$0xff] 0.0
      %150 = vst [vmem:[#allocation2 + $0x338] sm:$0xff] 0.0
      %151 = vst [vmem:[#allocation2 + $0x340] sm:$0xff] 0.0
      %152 = vst [vmem:[#allocation2 + $0x348] sm:$0xff] 0.0
      %153 = vst [vmem:[#allocation2 + $0x350] sm:$0xff] 0.0
      %154 = vst [vmem:[#allocation2 + $0x358] sm:$0xff] 0.0
      %155 = vst [vmem:[#allocation2 + $0x360] sm:$0xff] 0.0
      %156 = vst [vmem:[#allocation2 + $0x368] sm:$0xff] 0.0
      %157 = vst [vmem:[#allocation2 + $0x370] sm:$0xff] 0.0
      %158 = vst [vmem:[#allocation2 + $0x378] sm:$0xff] 0.0
      %159 = vst [vmem:[#allocation2 + $0x380] sm:$0xff] 0.0
      %160 = vst [vmem:[#allocation2 + $0x388] sm:$0xff] 0.0
      %161 = vst [vmem:[#allocation2 + $0x390] sm:$0xff] 0.0
      %162 = vst [vmem:[#allocation2 + $0x398] sm:$0xff] 0.0
      %163 = vst [vmem:[#allocation2 + $0x3a0] sm:$0xff] 0.0
      %164 = vst [vmem:[#allocation2 + $0x3a8] sm:$0xff] 0.0
      %165 = vst [vmem:[#allocation2 + $0x3b0] sm:$0xff] 0.0
      %166 = vst [vmem:[#allocation2 + $0x3b8] sm:$0xff] 0.0
      %167 = vst [vmem:[#allocation2 + $0x3c0] sm:$0xff] 0.0
      %168 = vst [vmem:[#allocation2 + $0x3c8] sm:$0xff] 0.0
      %169 = vst [vmem:[#allocation2 + $0x3d0] sm:$0xff] 0.0
      %170 = vst [vmem:[#allocation2 + $0x3d8] sm:$0xff] 0.0
      %171 = vst [vmem:[#allocation2 + $0x3e0] sm:$0xff] 0.0
      %172 = vst [vmem:[#allocation2 + $0x3e8] sm:$0xff] 0.0
      %173 = vst [vmem:[#allocation2 + $0x3f0] sm:$0xff] 0.0
      %174 = vst [vmem:[#allocation2 + $0x3f8] sm:$0xff] 0.0
    $region25: #{tpu_custom_call.1} parent=1 // pred_fallthru
      _
    %v175 = vld [vmem:[#allocation2] sm:$0xff]
    %v176 = vld [vmem:[#allocation2 + $0x8] sm:$0xff]
    %v177 = vld [vmem:[#allocation2 + $0x10] sm:$0xff]
    %v178 = vld [vmem:[#allocation2 + $0x18] sm:$0xff]
    %v179 = vld [vmem:[#allocation2 + $0x20] sm:$0xff]
    %v180 = vld [vmem:[#allocation2 + $0x28] sm:$0xff]
    %v181 = vld [vmem:[#allocation2 + $0x30] sm:$0xff]
    %v182 = vld [vmem:[#allocation2 + $0x38] sm:$0xff]
    %v183 = vld [vmem:[#allocation2 + $0x40] sm:$0xff]
    %v184 = vld [vmem:[#allocation2 + $0x48] sm:$0xff]
    %v185 = vld [vmem:[#allocation2 + $0x50] sm:$0xff]
    %v186 = vld [vmem:[#allocation2 + $0x58] sm:$0xff]
    %v187 = vld [vmem:[#allocation2 + $0x60] sm:$0xff]
    %v188 = vld [vmem:[#allocation2 + $0x68] sm:$0xff]
    %v189 = vld [vmem:[#allocation2 + $0x70] sm:$0xff]
    %v190 = vld [vmem:[#allocation2 + $0x78] sm:$0xff]
    %v191 = vld [vmem:[#allocation2 + $0x80] sm:$0xff]
    %v192 = vld [vmem:[#allocation2 + $0x88] sm:$0xff]
    %v193 = vld [vmem:[#allocation2 + $0x90] sm:$0xff]
    %v194 = vld [vmem:[#allocation2 + $0x98] sm:$0xff]
    %v195 = vld [vmem:[#allocation2 + $0xa0] sm:$0xff]
    %v196 = vld [vmem:[#allocation2 + $0xa8] sm:$0xff]
    %v197 = vld [vmem:[#allocation2 + $0xb0] sm:$0xff]
    %v198 = vld [vmem:[#allocation2 + $0xb8] sm:$0xff]
    %v199 = vld [vmem:[#allocation2 + $0xc0] sm:$0xff]
    %v200 = vld [vmem:[#allocation2 + $0xc8] sm:$0xff]
    %v201 = vld [vmem:[#allocation2 + $0xd0] sm:$0xff]
    %v202 = vld [vmem:[#allocation2 + $0xd8] sm:$0xff]
    %v203 = vld [vmem:[#allocation2 + $0xe0] sm:$0xff]
    %v204 = vld [vmem:[#allocation2 + $0xe8] sm:$0xff]
    %v205 = vld [vmem:[#allocation2 + $0xf0] sm:$0xff]
    %v206 = vld [vmem:[#allocation2 + $0xf8] sm:$0xff]
    %v207 = vld [vmem:[#allocation2 + $0x100] sm:$0xff]
    %v208 = vld [vmem:[#allocation2 + $0x108] sm:$0xff]
    %v209 = vld [vmem:[#allocation2 + $0x110] sm:$0xff]
    %v210 = vld [vmem:[#allocation2 + $0x118] sm:$0xff]
    %v211 = vld [vmem:[#allocation2 + $0x120] sm:$0xff]
    %v212 = vld [vmem:[#allocation2 + $0x128] sm:$0xff]
    %v213 = vld [vmem:[#allocation2 + $0x130] sm:$0xff]
    %v214 = vld [vmem:[#allocation2 + $0x138] sm:$0xff]
    %v215 = vld [vmem:[#allocation2 + $0x140] sm:$0xff]
    %v216 = vld [vmem:[#allocation2 + $0x148] sm:$0xff]
    %v217 = vld [vmem:[#allocation2 + $0x150] sm:$0xff]
    %v218 = vld [vmem:[#allocation2 + $0x158] sm:$0xff]
    %v219 = vld [vmem:[#allocation2 + $0x160] sm:$0xff]
    %v220 = vld [vmem:[#allocation2 + $0x168] sm:$0xff]
    %v221 = vld [vmem:[#allocation2 + $0x170] sm:$0xff]
    %v222 = vld [vmem:[#allocation2 + $0x178] sm:$0xff]
    %v223 = vld [vmem:[#allocation2 + $0x180] sm:$0xff]
    %v224 = vld [vmem:[#allocation2 + $0x188] sm:$0xff]
    %v225 = vld [vmem:[#allocation2 + $0x190] sm:$0xff]
    %v226 = vld [vmem:[#allocation2 + $0x198] sm:$0xff]
    %v227 = vld [vmem:[#allocation2 + $0x1a0] sm:$0xff]
    %v228 = vld [vmem:[#allocation2 + $0x1a8] sm:$0xff]
    %v229 = vld [vmem:[#allocation2 + $0x1b0] sm:$0xff]
    %v230 = vld [vmem:[#allocation2 + $0x1b8] sm:$0xff]
    %v231 = vld [vmem:[#allocation2 + $0x1c0] sm:$0xff]
    %v232 = vld [vmem:[#allocation2 + $0x1c8] sm:$0xff]
    %v233 = vld [vmem:[#allocation2 + $0x1d0] sm:$0xff]
    %v234 = vld [vmem:[#allocation2 + $0x1d8] sm:$0xff]
    %v235 = vld [vmem:[#allocation2 + $0x1e0] sm:$0xff]
    %v236 = vld [vmem:[#allocation2 + $0x1e8] sm:$0xff]
    %v237 = vld [vmem:[#allocation2 + $0x1f0] sm:$0xff]
    %v238 = vld [vmem:[#allocation2 + $0x1f8] sm:$0xff]
    %v239 = vld [vmem:[#allocation2 + $0x200] sm:$0xff]
    %v240 = vld [vmem:[#allocation2 + $0x208] sm:$0xff]
    %v241 = vld [vmem:[#allocation2 + $0x210] sm:$0xff]
    %v242 = vld [vmem:[#allocation2 + $0x218] sm:$0xff]
    %v243 = vld [vmem:[#allocation2 + $0x220] sm:$0xff]
    %v244 = vld [vmem:[#allocation2 + $0x228] sm:$0xff]
    %v245 = vld [vmem:[#allocation2 + $0x230] sm:$0xff]
    %v246 = vld [vmem:[#allocation2 + $0x238] sm:$0xff]
    %v247 = vld [vmem:[#allocation2 + $0x240] sm:$0xff]
    %v248 = vld [vmem:[#allocation2 + $0x248] sm:$0xff]
    %v249 = vld [vmem:[#allocation2 + $0x250] sm:$0xff]
    %v250 = vld [vmem:[#allocation2 + $0x258] sm:$0xff]
    %v251 = vld [vmem:[#allocation2 + $0x260] sm:$0xff]
    %v252 = vld [vmem:[#allocation2 + $0x268] sm:$0xff]
    %v253 = vld [vmem:[#allocation2 + $0x270] sm:$0xff]
    %v254 = vld [vmem:[#allocation2 + $0x278] sm:$0xff]
    %v255 = vld [vmem:[#allocation2 + $0x280] sm:$0xff]
    %v256 = vld [vmem:[#allocation2 + $0x288] sm:$0xff]
    %v257 = vld [vmem:[#allocation2 + $0x290] sm:$0xff]
    %v258 = vld [vmem:[#allocation2 + $0x298] sm:$0xff]
    %v259 = vld [vmem:[#allocation2 + $0x2a0] sm:$0xff]
    %v260 = vld [vmem:[#allocation2 + $0x2a8] sm:$0xff]
    %v261 = vld [vmem:[#allocation2 + $0x2b0] sm:$0xff]
    %v262 = vld [vmem:[#allocation2 + $0x2b8] sm:$0xff]
    %v263 = vld [vmem:[#allocation2 + $0x2c0] sm:$0xff]
    %v264 = vld [vmem:[#allocation2 + $0x2c8] sm:$0xff]
    %v265 = vld [vmem:[#allocation2 + $0x2d0] sm:$0xff]
    %v266 = vld [vmem:[#allocation2 + $0x2d8] sm:$0xff]
    %v267 = vld [vmem:[#allocation2 + $0x2e0] sm:$0xff]
    %v268 = vld [vmem:[#allocation2 + $0x2e8] sm:$0xff]
    %v269 = vld [vmem:[#allocation2 + $0x2f0] sm:$0xff]
    %v270 = vld [vmem:[#allocation2 + $0x2f8] sm:$0xff]
    %v271 = vld [vmem:[#allocation2 + $0x300] sm:$0xff]
    %v272 = vld [vmem:[#allocation2 + $0x308] sm:$0xff]
    %v273 = vld [vmem:[#allocation2 + $0x310] sm:$0xff]
    %v274 = vld [vmem:[#allocation2 + $0x318] sm:$0xff]
    %v275 = vld [vmem:[#allocation2 + $0x320] sm:$0xff]
    %v276 = vld [vmem:[#allocation2 + $0x328] sm:$0xff]
    %v277 = vld [vmem:[#allocation2 + $0x330] sm:$0xff]
    %v278 = vld [vmem:[#allocation2 + $0x338] sm:$0xff]
    %v279 = vld [vmem:[#allocation2 + $0x340] sm:$0xff]
    %v280 = vld [vmem:[#allocation2 + $0x348] sm:$0xff]
    %v281 = vld [vmem:[#allocation2 + $0x350] sm:$0xff]
    %v282 = vld [vmem:[#allocation2 + $0x358] sm:$0xff]
    %v283 = vld [vmem:[#allocation2 + $0x360] sm:$0xff]
    %v284 = vld [vmem:[#allocation2 + $0x368] sm:$0xff]
    %v285 = vld [vmem:[#allocation2 + $0x370] sm:$0xff]
    %v286 = vld [vmem:[#allocation2 + $0x378] sm:$0xff]
    %v287 = vld [vmem:[#allocation2 + $0x380] sm:$0xff]
    %v288 = vld [vmem:[#allocation2 + $0x388] sm:$0xff]
    %v289 = vld [vmem:[#allocation2 + $0x390] sm:$0xff]
    %v290 = vld [vmem:[#allocation2 + $0x398] sm:$0xff]
    %v291 = vld [vmem:[#allocation2 + $0x3a0] sm:$0xff]
    %v292 = vld [vmem:[#allocation2 + $0x3a8] sm:$0xff]
    %v293 = vld [vmem:[#allocation2 + $0x3b0] sm:$0xff]
    %v294 = vld [vmem:[#allocation2 + $0x3b8] sm:$0xff]
    %v295 = vld [vmem:[#allocation2 + $0x3c0] sm:$0xff]
    %v296 = vld [vmem:[#allocation2 + $0x3c8] sm:$0xff]
    %v297 = vld [vmem:[#allocation2 + $0x3d0] sm:$0xff]
    %v298 = vld [vmem:[#allocation2 + $0x3d8] sm:$0xff]
    %v299 = vld [vmem:[#allocation2 + $0x3e0] sm:$0xff]
    %v300 = vld [vmem:[#allocation2 + $0x3e8] sm:$0xff]
    %v301 = vld [vmem:[#allocation2 + $0x3f0] sm:$0xff]
    %v302 = vld [vmem:[#allocation2 + $0x3f8] sm:$0xff]
    %v303 = vld [vmem:[#allocation3] sm:$0xff]
    %v304 = vld [vmem:[#allocation3 + $0x8] sm:$0xff]
    %v305 = vld [vmem:[#allocation3 + $0x10] sm:$0xff]
    %v306 = vld [vmem:[#allocation3 + $0x18] sm:$0xff]
    %v307 = vld [vmem:[#allocation3 + $0x20] sm:$0xff]
    %v308 = vld [vmem:[#allocation3 + $0x28] sm:$0xff]
    %v309 = vld [vmem:[#allocation3 + $0x30] sm:$0xff]
    %v310 = vld [vmem:[#allocation3 + $0x38] sm:$0xff]
    %v311 = vld [vmem:[#allocation3 + $0x40] sm:$0xff]
    %v312 = vld [vmem:[#allocation3 + $0x48] sm:$0xff]
    %v313 = vld [vmem:[#allocation3 + $0x50] sm:$0xff]
    %v314 = vld [vmem:[#allocation3 + $0x58] sm:$0xff]
    %v315 = vld [vmem:[#allocation3 + $0x60] sm:$0xff]
    %v316 = vld [vmem:[#allocation3 + $0x68] sm:$0xff]
    %v317 = vld [vmem:[#allocation3 + $0x70] sm:$0xff]
    %v318 = vld [vmem:[#allocation3 + $0x78] sm:$0xff]
    %v319 = vld [vmem:[#allocation3 + $0x80] sm:$0xff]
    %v320 = vld [vmem:[#allocation3 + $0x88] sm:$0xff]
    %v321 = vld [vmem:[#allocation3 + $0x90] sm:$0xff]
    %v322 = vld [vmem:[#allocation3 + $0x98] sm:$0xff]
    %v323 = vld [vmem:[#allocation3 + $0xa0] sm:$0xff]
    %v324 = vld [vmem:[#allocation3 + $0xa8] sm:$0xff]
    %v325 = vld [vmem:[#allocation3 + $0xb0] sm:$0xff]
    %v326 = vld [vmem:[#allocation3 + $0xb8] sm:$0xff]
    %v327 = vld [vmem:[#allocation3 + $0xc0] sm:$0xff]
    %v328 = vld [vmem:[#allocation3 + $0xc8] sm:$0xff]
    %v329 = vld [vmem:[#allocation3 + $0xd0] sm:$0xff]
    %v330 = vld [vmem:[#allocation3 + $0xd8] sm:$0xff]
    %v331 = vld [vmem:[#allocation3 + $0xe0] sm:$0xff]
    %v332 = vld [vmem:[#allocation3 + $0xe8] sm:$0xff]
    %v333 = vld [vmem:[#allocation3 + $0xf0] sm:$0xff]
    %v334 = vld [vmem:[#allocation3 + $0xf8] sm:$0xff]
    %v335 = vld [vmem:[#allocation3 + $0x100] sm:$0xff]
    %v336 = vld [vmem:[#allocation3 + $0x108] sm:$0xff]
    %v337 = vld [vmem:[#allocation3 + $0x110] sm:$0xff]
    %v338 = vld [vmem:[#allocation3 + $0x118] sm:$0xff]
    %v339 = vld [vmem:[#allocation3 + $0x120] sm:$0xff]
    %v340 = vld [vmem:[#allocation3 + $0x128] sm:$0xff]
    %v341 = vld [vmem:[#allocation3 + $0x130] sm:$0xff]
    %v342 = vld [vmem:[#allocation3 + $0x138] sm:$0xff]
    %v343 = vld [vmem:[#allocation3 + $0x140] sm:$0xff]
    %v344 = vld [vmem:[#allocation3 + $0x148] sm:$0xff]
    %v345 = vld [vmem:[#allocation3 + $0x150] sm:$0xff]
    %v346 = vld [vmem:[#allocation3 + $0x158] sm:$0xff]
    %v347 = vld [vmem:[#allocation3 + $0x160] sm:$0xff]
    %v348 = vld [vmem:[#allocation3 + $0x168] sm:$0xff]
    %v349 = vld [vmem:[#allocation3 + $0x170] sm:$0xff]
    %v350 = vld [vmem:[#allocation3 + $0x178] sm:$0xff]
    %v351 = vld [vmem:[#allocation3 + $0x180] sm:$0xff]
    %v352 = vld [vmem:[#allocation3 + $0x188] sm:$0xff]
    %v353 = vld [vmem:[#allocation3 + $0x190] sm:$0xff]
    %v354 = vld [vmem:[#allocation3 + $0x198] sm:$0xff]
    %v355 = vld [vmem:[#allocation3 + $0x1a0] sm:$0xff]
    %v356 = vld [vmem:[#allocation3 + $0x1a8] sm:$0xff]
    %v357 = vld [vmem:[#allocation3 + $0x1b0] sm:$0xff]
    %v358 = vld [vmem:[#allocation3 + $0x1b8] sm:$0xff]
    %v359 = vld [vmem:[#allocation3 + $0x1c0] sm:$0xff]
    %v360 = vld [vmem:[#allocation3 + $0x1c8] sm:$0xff]
    %v361 = vld [vmem:[#allocation3 + $0x1d0] sm:$0xff]
    %v362 = vld [vmem:[#allocation3 + $0x1d8] sm:$0xff]
    %v363 = vld [vmem:[#allocation3 + $0x1e0] sm:$0xff]
    %v364 = vld [vmem:[#allocation3 + $0x1e8] sm:$0xff]
    %v365 = vld [vmem:[#allocation3 + $0x1f0] sm:$0xff]
    %v366 = vld [vmem:[#allocation3 + $0x1f8] sm:$0xff]
    %v367 = vld [vmem:[#allocation3 + $0x200] sm:$0xff]
    %v368 = vld [vmem:[#allocation3 + $0x208] sm:$0xff]
    %v369 = vld [vmem:[#allocation3 + $0x210] sm:$0xff]
    %v370 = vld [vmem:[#allocation3 + $0x218] sm:$0xff]
    %v371 = vld [vmem:[#allocation3 + $0x220] sm:$0xff]
    %v372 = vld [vmem:[#allocation3 + $0x228] sm:$0xff]
    %v373 = vld [vmem:[#allocation3 + $0x230] sm:$0xff]
    %v374 = vld [vmem:[#allocation3 + $0x238] sm:$0xff]
    %v375 = vld [vmem:[#allocation3 + $0x240] sm:$0xff]
    %v376 = vld [vmem:[#allocation3 + $0x248] sm:$0xff]
    %v377 = vld [vmem:[#allocation3 + $0x250] sm:$0xff]
    %v378 = vld [vmem:[#allocation3 + $0x258] sm:$0xff]
    %v379 = vld [vmem:[#allocation3 + $0x260] sm:$0xff]
    %v380 = vld [vmem:[#allocation3 + $0x268] sm:$0xff]
    %v381 = vld [vmem:[#allocation3 + $0x270] sm:$0xff]
    %v382 = vld [vmem:[#allocation3 + $0x278] sm:$0xff]
    %v383 = vld [vmem:[#allocation3 + $0x280] sm:$0xff]
    %v384 = vld [vmem:[#allocation3 + $0x288] sm:$0xff]
    %v385 = vld [vmem:[#allocation3 + $0x290] sm:$0xff]
    %v386 = vld [vmem:[#allocation3 + $0x298] sm:$0xff]
    %v387 = vld [vmem:[#allocation3 + $0x2a0] sm:$0xff]
    %v388 = vld [vmem:[#allocation3 + $0x2a8] sm:$0xff]
    %v389 = vld [vmem:[#allocation3 + $0x2b0] sm:$0xff]
    %v390 = vld [vmem:[#allocation3 + $0x2b8] sm:$0xff]
    %v391 = vld [vmem:[#allocation3 + $0x2c0] sm:$0xff]
    %v392 = vld [vmem:[#allocation3 + $0x2c8] sm:$0xff]
    %v393 = vld [vmem:[#allocation3 + $0x2d0] sm:$0xff]
    %v394 = vld [vmem:[#allocation3 + $0x2d8] sm:$0xff]
    %v395 = vld [vmem:[#allocation3 + $0x2e0] sm:$0xff]
    %v396 = vld [vmem:[#allocation3 + $0x2e8] sm:$0xff]
    %v397 = vld [vmem:[#allocation3 + $0x2f0] sm:$0xff]
    %v398 = vld [vmem:[#allocation3 + $0x2f8] sm:$0xff]
    %v399 = vld [vmem:[#allocation3 + $0x300] sm:$0xff]
    %v400 = vld [vmem:[#allocation3 + $0x308] sm:$0xff]
    %v401 = vld [vmem:[#allocation3 + $0x310] sm:$0xff]
    %v402 = vld [vmem:[#allocation3 + $0x318] sm:$0xff]
    %v403 = vld [vmem:[#allocation3 + $0x320] sm:$0xff]
    %v404 = vld [vmem:[#allocation3 + $0x328] sm:$0xff]
    %v405 = vld [vmem:[#allocation3 + $0x330] sm:$0xff]
    %v406 = vld [vmem:[#allocation3 + $0x338] sm:$0xff]
    %v407 = vld [vmem:[#allocation3 + $0x340] sm:$0xff]
    %v408 = vld [vmem:[#allocation3 + $0x348] sm:$0xff]
    %v409 = vld [vmem:[#allocation3 + $0x350] sm:$0xff]
    %v410 = vld [vmem:[#allocation3 + $0x358] sm:$0xff]
    %v411 = vld [vmem:[#allocation3 + $0x360] sm:$0xff]
    %v412 = vld [vmem:[#allocation3 + $0x368] sm:$0xff]
    %v413 = vld [vmem:[#allocation3 + $0x370] sm:$0xff]
    %v414 = vld [vmem:[#allocation3 + $0x378] sm:$0xff]
    %v415 = vld [vmem:[#allocation3 + $0x380] sm:$0xff]
    %v416 = vld [vmem:[#allocation3 + $0x388] sm:$0xff]
    %v417 = vld [vmem:[#allocation3 + $0x390] sm:$0xff]
    %v418 = vld [vmem:[#allocation3 + $0x398] sm:$0xff]
    %v419 = vld [vmem:[#allocation3 + $0x3a0] sm:$0xff]
    %v420 = vld [vmem:[#allocation3 + $0x3a8] sm:$0xff]
    %v421 = vld [vmem:[#allocation3 + $0x3b0] sm:$0xff]
    %v422 = vld [vmem:[#allocation3 + $0x3b8] sm:$0xff]
    %v423 = vld [vmem:[#allocation3 + $0x3c0] sm:$0xff]
    %v424 = vld [vmem:[#allocation3 + $0x3c8] sm:$0xff]
    %v425 = vld [vmem:[#allocation3 + $0x3d0] sm:$0xff]
    %v426 = vld [vmem:[#allocation3 + $0x3d8] sm:$0xff]
    %v427 = vld [vmem:[#allocation3 + $0x3e0] sm:$0xff]
    %v428 = vld [vmem:[#allocation3 + $0x3e8] sm:$0xff]
    %v429 = vld [vmem:[#allocation3 + $0x3f0] sm:$0xff]
    %v430 = vld [vmem:[#allocation3 + $0x3f8] sm:$0xff]
    %v431 = vld [vmem:[#allocation6] sm:$0xff]
    %v432 = vld [vmem:[#allocation6 + $0x8] sm:$0xff]
    %v433 = vld [vmem:[#allocation6 + $0x10] sm:$0xff]
    %v434 = vld [vmem:[#allocation6 + $0x18] sm:$0xff]
    %v435 = vld [vmem:[#allocation6 + $0x20] sm:$0xff]
    %v436 = vld [vmem:[#allocation6 + $0x28] sm:$0xff]
    %v437 = vld [vmem:[#allocation6 + $0x30] sm:$0xff]
    %v438 = vld [vmem:[#allocation6 + $0x38] sm:$0xff]
    %v439 = vld [vmem:[#allocation6 + $0x40] sm:$0xff]
    %v440 = vld [vmem:[#allocation6 + $0x48] sm:$0xff]
    %v441 = vld [vmem:[#allocation6 + $0x50] sm:$0xff]
    %v442 = vld [vmem:[#allocation6 + $0x58] sm:$0xff]
    %v443 = vld [vmem:[#allocation6 + $0x60] sm:$0xff]
    %v444 = vld [vmem:[#allocation6 + $0x68] sm:$0xff]
    %v445 = vld [vmem:[#allocation6 + $0x70] sm:$0xff]
    %v446 = vld [vmem:[#allocation6 + $0x78] sm:$0xff]
    %v447 = vld [vmem:[#allocation6 + $0x80] sm:$0xff]
    %v448 = vld [vmem:[#allocation6 + $0x88] sm:$0xff]
    %v449 = vld [vmem:[#allocation6 + $0x90] sm:$0xff]
    %v450 = vld [vmem:[#allocation6 + $0x98] sm:$0xff]
    %v451 = vld [vmem:[#allocation6 + $0xa0] sm:$0xff]
    %v452 = vld [vmem:[#allocation6 + $0xa8] sm:$0xff]
    %v453 = vld [vmem:[#allocation6 + $0xb0] sm:$0xff]
    %v454 = vld [vmem:[#allocation6 + $0xb8] sm:$0xff]
    %v455 = vld [vmem:[#allocation6 + $0xc0] sm:$0xff]
    %v456 = vld [vmem:[#allocation6 + $0xc8] sm:$0xff]
    %v457 = vld [vmem:[#allocation6 + $0xd0] sm:$0xff]
    %v458 = vld [vmem:[#allocation6 + $0xd8] sm:$0xff]
    %v459 = vld [vmem:[#allocation6 + $0xe0] sm:$0xff]
    %v460 = vld [vmem:[#allocation6 + $0xe8] sm:$0xff]
    %v461 = vld [vmem:[#allocation6 + $0xf0] sm:$0xff]
    %v462 = vld [vmem:[#allocation6 + $0xf8] sm:$0xff]
    %v463 = vld [vmem:[#allocation6 + $0x100] sm:$0xff]
    %v464 = vld [vmem:[#allocation6 + $0x108] sm:$0xff]
    %v465 = vld [vmem:[#allocation6 + $0x110] sm:$0xff]
    %v466 = vld [vmem:[#allocation6 + $0x118] sm:$0xff]
    %v467 = vld [vmem:[#allocation6 + $0x120] sm:$0xff]
    %v468 = vld [vmem:[#allocation6 + $0x128] sm:$0xff]
    %v469 = vld [vmem:[#allocation6 + $0x130] sm:$0xff]
    %v470 = vld [vmem:[#allocation6 + $0x138] sm:$0xff]
    %v471 = vld [vmem:[#allocation6 + $0x140] sm:$0xff]
    %v472 = vld [vmem:[#allocation6 + $0x148] sm:$0xff]
    %v473 = vld [vmem:[#allocation6 + $0x150] sm:$0xff]
    %v474 = vld [vmem:[#allocation6 + $0x158] sm:$0xff]
    %v475 = vld [vmem:[#allocation6 + $0x160] sm:$0xff]
    %v476 = vld [vmem:[#allocation6 + $0x168] sm:$0xff]
    %v477 = vld [vmem:[#allocation6 + $0x170] sm:$0xff]
    %v478 = vld [vmem:[#allocation6 + $0x178] sm:$0xff]
    %v479 = vld [vmem:[#allocation6 + $0x180] sm:$0xff]
    %v480 = vld [vmem:[#allocation6 + $0x188] sm:$0xff]
    %v481 = vld [vmem:[#allocation6 + $0x190] sm:$0xff]
    %v482 = vld [vmem:[#allocation6 + $0x198] sm:$0xff]
    %v483 = vld [vmem:[#allocation6 + $0x1a0] sm:$0xff]
    %v484 = vld [vmem:[#allocation6 + $0x1a8] sm:$0xff]
    %v485 = vld [vmem:[#allocation6 + $0x1b0] sm:$0xff]
    %v486 = vld [vmem:[#allocation6 + $0x1b8] sm:$0xff]
    %v487 = vld [vmem:[#allocation6 + $0x1c0] sm:$0xff]
    %v488 = vld [vmem:[#allocation6 + $0x1c8] sm:$0xff]
    %v489 = vld [vmem:[#allocation6 + $0x1d0] sm:$0xff]
    %v490 = vld [vmem:[#allocation6 + $0x1d8] sm:$0xff]
    %v491 = vld [vmem:[#allocation6 + $0x1e0] sm:$0xff]
    %v492 = vld [vmem:[#allocation6 + $0x1e8] sm:$0xff]
    %v493 = vld [vmem:[#allocation6 + $0x1f0] sm:$0xff]
    %v494 = vld [vmem:[#allocation6 + $0x1f8] sm:$0xff]
    %495 = vmatprep.subr.mxu0 %v432
    %496 = vmatpush1.msra.mxu0 %v431
    %497 = vmatprep.subr.mxu0 %v434
    %498 = vmatpush1.msra.mxu0 %v433
    %499 = vmatprep.subr.mxu0 %v436
    %500 = vmatpush1.msra.mxu0 %v435
    %501 = vmatprep.subr.mxu0 %v438
    %502 = vmatpush1.msra.mxu0 %v437
    %503 = vmatprep.subr.mxu0 %v440
    %504 = vmatpush1.msra.mxu0 %v439
    %505 = vmatprep.subr.mxu0 %v442
    %506 = vmatpush1.msra.mxu0 %v441
    %507 = vmatprep.subr.mxu0 %v444
    %508 = vmatpush1.msra.mxu0 %v443
    %509 = vmatprep.subr.mxu0 %v446
    %510 = vmatpush1.msra.mxu0 %v445
    %511 = vmatprep.subr.mxu0 %v448
    %512 = vmatpush1.msra.mxu0 %v447
    %513 = vmatprep.subr.mxu0 %v450
    %514 = vmatpush1.msra.mxu0 %v449
    %515 = vmatprep.subr.mxu0 %v452
    %516 = vmatpush1.msra.mxu0 %v451
    %517 = vmatprep.subr.mxu0 %v454
    %518 = vmatpush1.msra.mxu0 %v453
    %519 = vmatprep.subr.mxu0 %v456
    %520 = vmatpush1.msra.mxu0 %v455
    %521 = vmatprep.subr.mxu0 %v458
    %522 = vmatpush1.msra.mxu0 %v457
    %523 = vmatprep.subr.mxu0 %v460
    %524 = vmatpush1.msra.mxu0 %v459
    %525 = vmatprep.subr.mxu0 %v462
    %526 = vmatpush1.msra.mxu0 %v461
    %527 = vmatprep.subr.mxu0 %v464
    %528 = vmatpush1.msra.mxu0 %v463
    %529 = vmatprep.subr.mxu0 %v466
    %530 = vmatpush1.msra.mxu0 %v465
    %531 = vmatprep.subr.mxu0 %v468
    %532 = vmatpush1.msra.mxu0 %v467
    %533 = vmatprep.subr.mxu0 %v470
    %534 = vmatpush1.msra.mxu0 %v469
    %535 = vmatprep.subr.mxu0 %v472
    %536 = vmatpush1.msra.mxu0 %v471
    %537 = vmatprep.subr.mxu0 %v474
    %538 = vmatpush1.msra.mxu0 %v473
    %539 = vmatprep.subr.mxu0 %v476
    %540 = vmatpush1.msra.mxu0 %v475
    %541 = vmatprep.subr.mxu0 %v478
    %542 = vmatpush1.msra.mxu0 %v477
    %543 = vmatprep.subr.mxu0 %v480
    %544 = vmatpush1.msra.mxu0 %v479
    %545 = vmatprep.subr.mxu0 %v482
    %546 = vmatpush1.msra.mxu0 %v481
    %547 = vmatprep.subr.mxu0 %v484
    %548 = vmatpush1.msra.mxu0 %v483
    %549 = vmatprep.subr.mxu0 %v486
    %550 = vmatpush1.msra.mxu0 %v485
    %551 = vmatprep.subr.mxu0 %v488
    %552 = vmatpush1.msra.mxu0 %v487
    %553 = vmatprep.subr.mxu0 %v490
    %554 = vmatpush1.msra.mxu0 %v489
    %555 = vmatprep.subr.mxu0 %v492
    %556 = vmatpush1.msra.mxu0 %v491
    %557 = vmatprep.subr.mxu0 %v494
    %558 = vmatpush1.msra.mxu0 %v493
    %559 = vmatprep.mubr.f32.mxu0 %v304
    %560 = vmatmul.mubr.f32.gmra.mrb[0].mxu0 %v303
    %v561 = vpop.f32.mrb[0].mxu0
    %v562 = vadd.f32 0.0, %v561
    %v563 = vpop.f32.mrb[0].mxu0
    %v564 = vadd.f32 0.0, %v563
    %565 = vmatprep.mubr.f32.mxu0 %v306
    %566 = vmatmul.mubr.f32.gmra.mrb[0].mxu0 %v305
    %v567 = vpop.f32.mrb[0].mxu0
    %v568 = vadd.f32 0.0, %v567
    %v569 = vpop.f32.mrb[0].mxu0
    %v570 = vadd.f32 0.0, %v569
    %571 = vmatprep.mubr.f32.mxu0 %v308
    %572 = vmatmul.mubr.f32.gmra.mrb[0].mxu0 %v307
    %v573 = vpop.f32.mrb[0].mxu0
    %v574 = vadd.f32 0.0, %v573
    %v575 = vpop.f32.mrb[0].mxu0
    %v576 = vadd.f32 0.0, %v575
    %577 = vmatprep.mubr.f32.mxu0 %v310
    %578 = vmatmul.mubr.f32.gmra.mrb[0].mxu0 %v309
    %v579 = vpop.f32.mrb[0].mxu0
    %v580 = vadd.f32 0.0, %v579
    %v581 = vpop.f32.mrb[0].mxu0
    %v582 = vadd.f32 0.0, %v581
    %583 = vmatprep.mubr.f32.mxu0 %v312
    %584 = vmatmul.mubr.f32.gmra.mrb[0].mxu0 %v311
    %v585 = vpop.f32.mrb[0].mxu0
    %v586 = vadd.f32 0.0, %v585
    %v587 = vpop.f32.mrb[0].mxu0
    %v588 = vadd.f32 0.0, %v587
    %589 = vmatprep.mubr.f32.mxu0 %v314
    %590 = vmatmul.mubr.f32.gmra.mrb[0].mxu0 %v313
    %v591 = vpop.f32.mrb[0].mxu0
    %v592 = vadd.f32 0.0, %v591
    %v593 = vpop.f32.mrb[0].mxu0
    %v594 = vadd.f32 0.0, %v593
    %595 = vmatprep.mubr.f32.mxu0 %v316
    %596 = vmatmul.mubr.f32.gmra.mrb[0].mxu0 %v315
    %v597 = vpop.f32.mrb[0].mxu0
    %v598 = vadd.f32 0.0, %v597
    %v599 = vpop.f32.mrb[0].mxu0
    %v600 = vadd.f32 0.0, %v599
    %601 = vmatprep.mubr.f32.mxu0 %v318
    %602 = vmatmul.mubr.f32.gmra.mrb[0].mxu0 %v317
    %v603 = vpop.f32.mrb[0].mxu0
    %v604 = vadd.f32 0.0, %v603
    %v605 = vpop.f32.mrb[0].mxu0
    %v606 = vadd.f32 0.0, %v605
    %607 = vmatprep.mubr.f32.mxu0 %v320
    %608 = vmatmul.mubr.f32.gmra.mrb[0].mxu0 %v319
    %v609 = vpop.f32.mrb[0].mxu0
    %v610 = vadd.f32 0.0, %v609
    %v611 = vpop.f32.mrb[0].mxu0
    %v612 = vadd.f32 0.0, %v611
    %613 = vmatprep.mubr.f32.mxu0 %v322
    %614 = vmatmul.mubr.f32.gmra.mrb[0].mxu0 %v321
    %v615 = vpop.f32.mrb[0].mxu0
    %v616 = vadd.f32 0.0, %v615
    %v617 = vpop.f32.mrb[0].mxu0
    %v618 = vadd.f32 0.0, %v617
    %619 = vmatprep.mubr.f32.mxu0 %v324
    %620 = vmatmul.mubr.f32.gmra.mrb[0].mxu0 %v323
    %v621 = vpop.f32.mrb[0].mxu0
    %v622 = vadd.f32 0.0, %v621
    %v623 = vpop.f32.mrb[0].mxu0
    %v624 = vadd.f32 0.0, %v623
    %625 = vmatprep.mubr.f32.mxu0 %v326
    %626 = vmatmul.mubr.f32.gmra.mrb[0].mxu0 %v325
    %v627 = vpop.f32.mrb[0].mxu0
    %v628 = vadd.f32 0.0, %v627
    %v629 = vpop.f32.mrb[0].mxu0
    %v630 = vadd.f32 0.0, %v629
    %631 = vmatprep.mubr.f32.mxu0 %v328
    %632 = vmatmul.mubr.f32.gmra.mrb[0].mxu0 %v327
    %v633 = vpop.f32.mrb[0].mxu0
    %v634 = vadd.f32 0.0, %v633
    %v635 = vpop.f32.mrb[0].mxu0
    %v636 = vadd.f32 0.0, %v635
    %637 = vmatprep.mubr.f32.mxu0 %v330
    %638 = vmatmul.mubr.f32.gmra.mrb[0].mxu0 %v329
    %v639 = vpop.f32.mrb[0].mxu0
    %v640 = vadd.f32 0.0, %v639
    %v641 = vpop.f32.mrb[0].mxu0
    %v642 = vadd.f32 0.0, %v641
    %643 = vmatprep.mubr.f32.mxu0 %v332
    %644 = vmatmul.mubr.f32.gmra.mrb[0].mxu0 %v331
    %v645 = vpop.f32.mrb[0].mxu0
    %v646 = vadd.f32 0.0, %v645
    %v647 = vpop.f32.mrb[0].mxu0
    %v648 = vadd.f32 0.0, %v647
    %649 = vmatprep.mubr.f32.mxu0 %v334
    %650 = vmatmul.mubr.f32.gmra.mrb[0].mxu0 %v333
    %v651 = vpop.f32.mrb[0].mxu0
    %v652 = vadd.f32 0.0, %v651
    %v653 = vpop.f32.mrb[0].mxu0
    %v654 = vadd.f32 0.0, %v653
    %655 = vmatprep.mubr.f32.mxu0 %v336
    %656 = vmatmul.mubr.f32.gmra.mrb[0].mxu0 %v335
    %v657 = vpop.f32.mrb[0].mxu0
    %v658 = vadd.f32 0.0, %v657
    %v659 = vpop.f32.mrb[0].mxu0
    %v660 = vadd.f32 0.0, %v659
    %661 = vmatprep.mubr.f32.mxu0 %v338
    %662 = vmatmul.mubr.f32.gmra.mrb[0].mxu0 %v337
    %v663 = vpop.f32.mrb[0].mxu0
    %v664 = vadd.f32 0.0, %v663
    %v665 = vpop.f32.mrb[0].mxu0
    %v666 = vadd.f32 0.0, %v665
    %667 = vmatprep.mubr.f32.mxu0 %v340
    %668 = vmatmul.mubr.f32.gmra.mrb[0].mxu0 %v339
    %v669 = vpop.f32.mrb[0].mxu0
    %v670 = vadd.f32 0.0, %v669
    %v671 = vpop.f32.mrb[0].mxu0
    %v672 = vadd.f32 0.0, %v671
    %673 = vmatprep.mubr.f32.mxu0 %v342
    %674 = vmatmul.mubr.f32.gmra.mrb[0].mxu0 %v341
    %v675 = vpop.f32.mrb[0].mxu0
    %v676 = vadd.f32 0.0, %v675
    %v677 = vpop.f32.mrb[0].mxu0
    %v678 = vadd.f32 0.0, %v677
    %679 = vmatprep.mubr.f32.mxu0 %v344
    %680 = vmatmul.mubr.f32.gmra.mrb[0].mxu0 %v343
    %v681 = vpop.f32.mrb[0].mxu0
    %v682 = vadd.f32 0.0, %v681
    %v683 = vpop.f32.mrb[0].mxu0
    %v684 = vadd.f32 0.0, %v683
    %685 = vmatprep.mubr.f32.mxu0 %v346
    %686 = vmatmul.mubr.f32.gmra.mrb[0].mxu0 %v345
    %v687 = vpop.f32.mrb[0].mxu0
    %v688 = vadd.f32 0.0, %v687
    %v689 = vpop.f32.mrb[0].mxu0
    %v690 = vadd.f32 0.0, %v689
    %691 = vmatprep.mubr.f32.mxu0 %v348
    %692 = vmatmul.mubr.f32.gmra.mrb[0].mxu0 %v347
    %v693 = vpop.f32.mrb[0].mxu0
    %v694 = vadd.f32 0.0, %v693
    %v695 = vpop.f32.mrb[0].mxu0
    %v696 = vadd.f32 0.0, %v695
    %697 = vmatprep.mubr.f32.mxu0 %v350
    %698 = vmatmul.mubr.f32.gmra.mrb[0].mxu0 %v349
    %v699 = vpop.f32.mrb[0].mxu0
    %v700 = vadd.f32 0.0, %v699
    %v701 = vpop.f32.mrb[0].mxu0
    %v702 = vadd.f32 0.0, %v701
    %703 = vmatprep.mubr.f32.mxu0 %v352
    %704 = vmatmul.mubr.f32.gmra.mrb[0].mxu0 %v351
    %v705 = vpop.f32.mrb[0].mxu0
    %v706 = vadd.f32 0.0, %v705
    %v707 = vpop.f32.mrb[0].mxu0
    %v708 = vadd.f32 0.0, %v707
    %709 = vmatprep.mubr.f32.mxu0 %v354
    %710 = vmatmul.mubr.f32.gmra.mrb[0].mxu0 %v353
    %v711 = vpop.f32.mrb[0].mxu0
    %v712 = vadd.f32 0.0, %v711
    %v713 = vpop.f32.mrb[0].mxu0
    %v714 = vadd.f32 0.0, %v713
    %715 = vmatprep.mubr.f32.mxu0 %v356
    %716 = vmatmul.mubr.f32.gmra.mrb[0].mxu0 %v355
    %v717 = vpop.f32.mrb[0].mxu0
    %v718 = vadd.f32 0.0, %v717
    %v719 = vpop.f32.mrb[0].mxu0
    %v720 = vadd.f32 0.0, %v719
    %721 = vmatprep.mubr.f32.mxu0 %v358
    %722 = vmatmul.mubr.f32.gmra.mrb[0].mxu0 %v357
    %v723 = vpop.f32.mrb[0].mxu0
    %v724 = vadd.f32 0.0, %v723
    %v725 = vpop.f32.mrb[0].mxu0
    %v726 = vadd.f32 0.0, %v725
    %727 = vmatprep.mubr.f32.mxu0 %v360
    %728 = vmatmul.mubr.f32.gmra.mrb[0].mxu0 %v359
    %v729 = vpop.f32.mrb[0].mxu0
    %v730 = vadd.f32 0.0, %v729
    %v731 = vpop.f32.mrb[0].mxu0
    %v732 = vadd.f32 0.0, %v731
    %733 = vmatprep.mubr.f32.mxu0 %v362
    %734 = vmatmul.mubr.f32.gmra.mrb[0].mxu0 %v361
    %v735 = vpop.f32.mrb[0].mxu0
    %v736 = vadd.f32 0.0, %v735
    %v737 = vpop.f32.mrb[0].mxu0
    %v738 = vadd.f32 0.0, %v737
    %739 = vmatprep.mubr.f32.mxu0 %v364
    %740 = vmatmul.mubr.f32.gmra.mrb[0].mxu0 %v363
    %v741 = vpop.f32.mrb[0].mxu0
    %v742 = vadd.f32 0.0, %v741
    %v743 = vpop.f32.mrb[0].mxu0
    %v744 = vadd.f32 0.0, %v743
    %745 = vmatprep.mubr.f32.mxu0 %v366
    %746 = vmatmul.mubr.f32.gmra.mrb[0].mxu0 %v365
    %v747 = vpop.f32.mrb[0].mxu0
    %v748 = vadd.f32 0.0, %v747
    %v749 = vpop.f32.mrb[0].mxu0
    %v750 = vadd.f32 0.0, %v749
    %751 = vmatprep.mubr.f32.mxu0 %v368
    %752 = vmatmul.mubr.f32.gmra.mrb[0].mxu0 %v367
    %v753 = vpop.f32.mrb[0].mxu0
    %v754 = vadd.f32 0.0, %v753
    %v755 = vpop.f32.mrb[0].mxu0
    %v756 = vadd.f32 0.0, %v755
    %757 = vmatprep.mubr.f32.mxu0 %v370
    %758 = vmatmul.mubr.f32.gmra.mrb[0].mxu0 %v369
    %v759 = vpop.f32.mrb[0].mxu0
    %v760 = vadd.f32 0.0, %v759
    %v761 = vpop.f32.mrb[0].mxu0
    %v762 = vadd.f32 0.0, %v761
    %763 = vmatprep.mubr.f32.mxu0 %v372
    %764 = vmatmul.mubr.f32.gmra.mrb[0].mxu0 %v371
    %v765 = vpop.f32.mrb[0].mxu0
    %v766 = vadd.f32 0.0, %v765
    %v767 = vpop.f32.mrb[0].mxu0
    %v768 = vadd.f32 0.0, %v767
    %769 = vmatprep.mubr.f32.mxu0 %v374
    %770 = vmatmul.mubr.f32.gmra.mrb[0].mxu0 %v373
    %v771 = vpop.f32.mrb[0].mxu0
    %v772 = vadd.f32 0.0, %v771
    %v773 = vpop.f32.mrb[0].mxu0
    %v774 = vadd.f32 0.0, %v773
    %775 = vmatprep.mubr.f32.mxu0 %v376
    %776 = vmatmul.mubr.f32.gmra.mrb[0].mxu0 %v375
    %v777 = vpop.f32.mrb[0].mxu0
    %v778 = vadd.f32 0.0, %v777
    %v779 = vpop.f32.mrb[0].mxu0
    %v780 = vadd.f32 0.0, %v779
    %781 = vmatprep.mubr.f32.mxu0 %v378
    %782 = vmatmul.mubr.f32.gmra.mrb[0].mxu0 %v377
    %v783 = vpop.f32.mrb[0].mxu0
    %v784 = vadd.f32 0.0, %v783
    %v785 = vpop.f32.mrb[0].mxu0
    %v786 = vadd.f32 0.0, %v785
    %787 = vmatprep.mubr.f32.mxu0 %v380
    %788 = vmatmul.mubr.f32.gmra.mrb[0].mxu0 %v379
    %v789 = vpop.f32.mrb[0].mxu0
    %v790 = vadd.f32 0.0, %v789
    %v791 = vpop.f32.mrb[0].mxu0
    %v792 = vadd.f32 0.0, %v791
    %793 = vmatprep.mubr.f32.mxu0 %v382
    %794 = vmatmul.mubr.f32.gmra.mrb[0].mxu0 %v381
    %v795 = vpop.f32.mrb[0].mxu0
    %v796 = vadd.f32 0.0, %v795
    %v797 = vpop.f32.mrb[0].mxu0
    %v798 = vadd.f32 0.0, %v797
    %799 = vmatprep.mubr.f32.mxu0 %v384
    %800 = vmatmul.mubr.f32.gmra.mrb[0].mxu0 %v383
    %v801 = vpop.f32.mrb[0].mxu0
    %v802 = vadd.f32 0.0, %v801
    %v803 = vpop.f32.mrb[0].mxu0
    %v804 = vadd.f32 0.0, %v803
    %805 = vmatprep.mubr.f32.mxu0 %v386
    %806 = vmatmul.mubr.f32.gmra.mrb[0].mxu0 %v385
    %v807 = vpop.f32.mrb[0].mxu0
    %v808 = vadd.f32 0.0, %v807
    %v809 = vpop.f32.mrb[0].mxu0
    %v810 = vadd.f32 0.0, %v809
    %811 = vmatprep.mubr.f32.mxu0 %v388
    %812 = vmatmul.mubr.f32.gmra.mrb[0].mxu0 %v387
    %v813 = vpop.f32.mrb[0].mxu0
    %v814 = vadd.f32 0.0, %v813
    %v815 = vpop.f32.mrb[0].mxu0
    %v816 = vadd.f32 0.0, %v815
    %817 = vmatprep.mubr.f32.mxu0 %v390
    %818 = vmatmul.mubr.f32.gmra.mrb[0].mxu0 %v389
    %v819 = vpop.f32.mrb[0].mxu0
    %v820 = vadd.f32 0.0, %v819
    %v821 = vpop.f32.mrb[0].mxu0
    %v822 = vadd.f32 0.0, %v821
    %823 = vmatprep.mubr.f32.mxu0 %v392
    %824 = vmatmul.mubr.f32.gmra.mrb[0].mxu0 %v391
    %v825 = vpop.f32.mrb[0].mxu0
    %v826 = vadd.f32 0.0, %v825
    %v827 = vpop.f32.mrb[0].mxu0
    %v828 = vadd.f32 0.0, %v827
    %829 = vmatprep.mubr.f32.mxu0 %v394
    %830 = vmatmul.mubr.f32.gmra.mrb[0].mxu0 %v393
    %v831 = vpop.f32.mrb[0].mxu0
    %v832 = vadd.f32 0.0, %v831
    %v833 = vpop.f32.mrb[0].mxu0
    %v834 = vadd.f32 0.0, %v833
    %835 = vmatprep.mubr.f32.mxu0 %v396
    %836 = vmatmul.mubr.f32.gmra.mrb[0].mxu0 %v395
    %v837 = vpop.f32.mrb[0].mxu0
    %v838 = vadd.f32 0.0, %v837
    %v839 = vpop.f32.mrb[0].mxu0
    %v840 = vadd.f32 0.0, %v839
    %841 = vmatprep.mubr.f32.mxu0 %v398
    %842 = vmatmul.mubr.f32.gmra.mrb[0].mxu0 %v397
    %v843 = vpop.f32.mrb[0].mxu0
    %v844 = vadd.f32 0.0, %v843
    %v845 = vpop.f32.mrb[0].mxu0
    %v846 = vadd.f32 0.0, %v845
    %847 = vmatprep.mubr.f32.mxu0 %v400
    %848 = vmatmul.mubr.f32.gmra.mrb[0].mxu0 %v399
    %v849 = vpop.f32.mrb[0].mxu0
    %v850 = vadd.f32 0.0, %v849
    %v851 = vpop.f32.mrb[0].mxu0
    %v852 = vadd.f32 0.0, %v851
    %853 = vmatprep.mubr.f32.mxu0 %v402
    %854 = vmatmul.mubr.f32.gmra.mrb[0].mxu0 %v401
    %v855 = vpop.f32.mrb[0].mxu0
    %v856 = vadd.f32 0.0, %v855
    %v857 = vpop.f32.mrb[0].mxu0
    %v858 = vadd.f32 0.0, %v857
    %859 = vmatprep.mubr.f32.mxu0 %v404
    %860 = vmatmul.mubr.f32.gmra.mrb[0].mxu0 %v403
    %v861 = vpop.f32.mrb[0].mxu0
    %v862 = vadd.f32 0.0, %v861
    %v863 = vpop.f32.mrb[0].mxu0
    %v864 = vadd.f32 0.0, %v863
    %865 = vmatprep.mubr.f32.mxu0 %v406
    %866 = vmatmul.mubr.f32.gmra.mrb[0].mxu0 %v405
    %v867 = vpop.f32.mrb[0].mxu0
    %v868 = vadd.f32 0.0, %v867
    %v869 = vpop.f32.mrb[0].mxu0
    %v870 = vadd.f32 0.0, %v869
    %871 = vmatprep.mubr.f32.mxu0 %v408
    %872 = vmatmul.mubr.f32.gmra.mrb[0].mxu0 %v407
    %v873 = vpop.f32.mrb[0].mxu0
    %v874 = vadd.f32 0.0, %v873
    %v875 = vpop.f32.mrb[0].mxu0
    %v876 = vadd.f32 0.0, %v875
    %877 = vmatprep.mubr.f32.mxu0 %v410
    %878 = vmatmul.mubr.f32.gmra.mrb[0].mxu0 %v409
    %v879 = vpop.f32.mrb[0].mxu0
    %v880 = vadd.f32 0.0, %v879
    %v881 = vpop.f32.mrb[0].mxu0
    %v882 = vadd.f32 0.0, %v881
    %883 = vmatprep.mubr.f32.mxu0 %v412
    %884 = vmatmul.mubr.f32.gmra.mrb[0].mxu0 %v411
    %v885 = vpop.f32.mrb[0].mxu0
    %v886 = vadd.f32 0.0, %v885
    %v887 = vpop.f32.mrb[0].mxu0
    %v888 = vadd.f32 0.0, %v887
    %889 = vmatprep.mubr.f32.mxu0 %v414
    %890 = vmatmul.mubr.f32.gmra.mrb[0].mxu0 %v413
    %v891 = vpop.f32.mrb[0].mxu0
    %v892 = vadd.f32 0.0, %v891
    %v893 = vpop.f32.mrb[0].mxu0
    %v894 = vadd.f32 0.0, %v893
    %895 = vmatprep.mubr.f32.mxu0 %v416
    %896 = vmatmul.mubr.f32.gmra.mrb[0].mxu0 %v415
    %v897 = vpop.f32.mrb[0].mxu0
    %v898 = vadd.f32 0.0, %v897
    %v899 = vpop.f32.mrb[0].mxu0
    %v900 = vadd.f32 0.0, %v899
    %901 = vmatprep.mubr.f32.mxu0 %v418
    %902 = vmatmul.mubr.f32.gmra.mrb[0].mxu0 %v417
    %v903 = vpop.f32.mrb[0].mxu0
    %v904 = vadd.f32 0.0, %v903
    %v905 = vpop.f32.mrb[0].mxu0
    %v906 = vadd.f32 0.0, %v905
    %907 = vmatprep.mubr.f32.mxu0 %v420
    %908 = vmatmul.mubr.f32.gmra.mrb[0].mxu0 %v419
    %v909 = vpop.f32.mrb[0].mxu0
    %v910 = vadd.f32 0.0, %v909
    %v911 = vpop.f32.mrb[0].mxu0
    %v912 = vadd.f32 0.0, %v911
    %913 = vmatprep.mubr.f32.mxu0 %v422
    %914 = vmatmul.mubr.f32.gmra.mrb[0].mxu0 %v421
    %v915 = vpop.f32.mrb[0].mxu0
    %v916 = vadd.f32 0.0, %v915
    %v917 = vpop.f32.mrb[0].mxu0
    %v918 = vadd.f32 0.0, %v917
    %919 = vmatprep.mubr.f32.mxu0 %v424
    %920 = vmatmul.mubr.f32.gmra.mrb[0].mxu0 %v423
    %v921 = vpop.f32.mrb[0].mxu0
    %v922 = vadd.f32 0.0, %v921
    %v923 = vpop.f32.mrb[0].mxu0
    %v924 = vadd.f32 0.0, %v923
    %925 = vmatprep.mubr.f32.mxu0 %v426
    %926 = vmatmul.mubr.f32.gmra.mrb[0].mxu0 %v425
    %v927 = vpop.f32.mrb[0].mxu0
    %v928 = vadd.f32 0.0, %v927
    %v929 = vpop.f32.mrb[0].mxu0
    %v930 = vadd.f32 0.0, %v929
    %931 = vmatprep.mubr.f32.mxu0 %v428
    %932 = vmatmul.mubr.f32.gmra.mrb[0].mxu0 %v427
    %v933 = vpop.f32.mrb[0].mxu0
    %v934 = vadd.f32 0.0, %v933
    %v935 = vpop.f32.mrb[0].mxu0
    %v936 = vadd.f32 0.0, %v935
    %937 = vmatprep.mubr.f32.mxu0 %v430
    %938 = vmatmul.mubr.f32.gmra.mrb[0].mxu0 %v429
    %v939 = vpop.f32.mrb[0].mxu0
    %v940 = vadd.f32 0.0, %v939
    %v941 = vpop.f32.mrb[0].mxu0
    %v942 = vadd.f32 0.0, %v941
    %943 = vdwg.mxu0
    %v944 = vadd.f32 %v175, %v562
    %v945 = vadd.f32 %v176, %v564
    %v946 = vadd.f32 %v177, %v568
    %v947 = vadd.f32 %v178, %v570
    %v948 = vadd.f32 %v179, %v574
    %v949 = vadd.f32 %v180, %v576
    %v950 = vadd.f32 %v181, %v580
    %v951 = vadd.f32 %v182, %v582
    %v952 = vadd.f32 %v183, %v586
    %v953 = vadd.f32 %v184, %v588
    %v954 = vadd.f32 %v185, %v592
    %v955 = vadd.f32 %v186, %v594
    %v956 = vadd.f32 %v187, %v598
    %v957 = vadd.f32 %v188, %v600
    %v958 = vadd.f32 %v189, %v604
    %v959 = vadd.f32 %v190, %v606
    %v960 = vadd.f32 %v191, %v610
    %v961 = vadd.f32 %v192, %v612
    %v962 = vadd.f32 %v193, %v616
    %v963 = vadd.f32 %v194, %v618
    %v964 = vadd.f32 %v195, %v622
    %v965 = vadd.f32 %v196, %v624
    %v966 = vadd.f32 %v197, %v628
    %v967 = vadd.f32 %v198, %v630
    %v968 = vadd.f32 %v199, %v634
    %v969 = vadd.f32 %v200, %v636
    %v970 = vadd.f32 %v201, %v640
    %v971 = vadd.f32 %v202, %v642
    %v972 = vadd.f32 %v203, %v646
    %v973 = vadd.f32 %v204, %v648
    %v974 = vadd.f32 %v205, %v652
    %v975 = vadd.f32 %v206, %v654
    %v976 = vadd.f32 %v207, %v658
    %v977 = vadd.f32 %v208, %v660
    %v978 = vadd.f32 %v209, %v664
    %v979 = vadd.f32 %v210, %v666
    %v980 = vadd.f32 %v211, %v670
    %v981 = vadd.f32 %v212, %v672
    %v982 = vadd.f32 %v213, %v676
    %v983 = vadd.f32 %v214, %v678
    %v984 = vadd.f32 %v215, %v682
    %v985 = vadd.f32 %v216, %v684
    %v986 = vadd.f32 %v217, %v688
    %v987 = vadd.f32 %v218, %v690
    %v988 = vadd.f32 %v219, %v694
    %v989 = vadd.f32 %v220, %v696
    %v990 = vadd.f32 %v221, %v700
    %v991 = vadd.f32 %v222, %v702
    %v992 = vadd.f32 %v223, %v706
    %v993 = vadd.f32 %v224, %v708
    %v994 = vadd.f32 %v225, %v712
    %v995 = vadd.f32 %v226, %v714
    %v996 = vadd.f32 %v227, %v718
    %v997 = vadd.f32 %v228, %v720
    %v998 = vadd.f32 %v229, %v724
    %v999 = vadd.f32 %v230, %v726
    %v1000 = vadd.f32 %v231, %v730
    %v1001 = vadd.f32 %v232, %v732
    %v1002 = vadd.f32 %v233, %v736
    %v1003 = vadd.f32 %v234, %v738
    %v1004 = vadd.f32 %v235, %v742
    %v1005 = vadd.f32 %v236, %v744
    %v1006 = vadd.f32 %v237, %v748
    %v1007 = vadd.f32 %v238, %v750
    %v1008 = vadd.f32 %v239, %v754
    %v1009 = vadd.f32 %v240, %v756
    %v1010 = vadd.f32 %v241, %v760
    %v1011 = vadd.f32 %v242, %v762
    %v1012 = vadd.f32 %v243, %v766
    %v1013 = vadd.f32 %v244, %v768
    %v1014 = vadd.f32 %v245, %v772
    %v1015 = vadd.f32 %v246, %v774
    %v1016 = vadd.f32 %v247, %v778
    %v1017 = vadd.f32 %v248, %v780
    %v1018 = vadd.f32 %v249, %v784
    %v1019 = vadd.f32 %v250, %v786
    %v1020 = vadd.f32 %v251, %v790
    %v1021 = vadd.f32 %v252, %v792
    %v1022 = vadd.f32 %v253, %v796
    %v1023 = vadd.f32 %v254, %v798
    %v1024 = vadd.f32 %v255, %v802
    %v1025 = vadd.f32 %v256, %v804
    %v1026 = vadd.f32 %v257, %v808
    %v1027 = vadd.f32 %v258, %v810
    %v1028 = vadd.f32 %v259, %v814
    %v1029 = vadd.f32 %v260, %v816
    %v1030 = vadd.f32 %v261, %v820
    %v1031 = vadd.f32 %v262, %v822
    %v1032 = vadd.f32 %v263, %v826
    %v1033 = vadd.f32 %v264, %v828
    %v1034 = vadd.f32 %v265, %v832
    %v1035 = vadd.f32 %v266, %v834
    %v1036 = vadd.f32 %v267, %v838
    %v1037 = vadd.f32 %v268, %v840
    %v1038 = vadd.f32 %v269, %v844
    %v1039 = vadd.f32 %v270, %v846
    %v1040 = vadd.f32 %v271, %v850
    %v1041 = vadd.f32 %v272, %v852
    %v1042 = vadd.f32 %v273, %v856
    %v1043 = vadd.f32 %v274, %v858
    %v1044 = vadd.f32 %v275, %v862
    %v1045 = vadd.f32 %v276, %v864
    %v1046 = vadd.f32 %v277, %v868
    %v1047 = vadd.f32 %v278, %v870
    %v1048 = vadd.f32 %v279, %v874
    %v1049 = vadd.f32 %v280, %v876
    %v1050 = vadd.f32 %v281, %v880
    %v1051 = vadd.f32 %v282, %v882
    %v1052 = vadd.f32 %v283, %v886
    %v1053 = vadd.f32 %v284, %v888
    %v1054 = vadd.f32 %v285, %v892
    %v1055 = vadd.f32 %v286, %v894
    %v1056 = vadd.f32 %v287, %v898
    %v1057 = vadd.f32 %v288, %v900
    %v1058 = vadd.f32 %v289, %v904
    %v1059 = vadd.f32 %v290, %v906
    %v1060 = vadd.f32 %v291, %v910
    %v1061 = vadd.f32 %v292, %v912
    %v1062 = vadd.f32 %v293, %v916
    %v1063 = vadd.f32 %v294, %v918
    %v1064 = vadd.f32 %v295, %v922
    %v1065 = vadd.f32 %v296, %v924
    %v1066 = vadd.f32 %v297, %v928
    %v1067 = vadd.f32 %v298, %v930
    %v1068 = vadd.f32 %v299, %v934
    %v1069 = vadd.f32 %v300, %v936
    %v1070 = vadd.f32 %v301, %v940
    %v1071 = vadd.f32 %v302, %v942
    %1072 = vst [vmem:[#allocation2] sm:$0xff] %v944
    %1073 = vst [vmem:[#allocation2 + $0x8] sm:$0xff] %v945
    %1074 = vst [vmem:[#allocation2 + $0x10] sm:$0xff] %v946
    %1075 = vst [vmem:[#allocation2 + $0x18] sm:$0xff] %v947
    %1076 = vst [vmem:[#allocation2 + $0x20] sm:$0xff] %v948
    %1077 = vst [vmem:[#allocation2 + $0x28] sm:$0xff] %v949
    %1078 = vst [vmem:[#allocation2 + $0x30] sm:$0xff] %v950
    %1079 = vst [vmem:[#allocation2 + $0x38] sm:$0xff] %v951
    %1080 = vst [vmem:[#allocation2 + $0x40] sm:$0xff] %v952
    %1081 = vst [vmem:[#allocation2 + $0x48] sm:$0xff] %v953
    %1082 = vst [vmem:[#allocation2 + $0x50] sm:$0xff] %v954
    %1083 = vst [vmem:[#allocation2 + $0x58] sm:$0xff] %v955
    %1084 = vst [vmem:[#allocation2 + $0x60] sm:$0xff] %v956
    %1085 = vst [vmem:[#allocation2 + $0x68] sm:$0xff] %v957
    %1086 = vst [vmem:[#allocation2 + $0x70] sm:$0xff] %v958
    %1087 = vst [vmem:[#allocation2 + $0x78] sm:$0xff] %v959
    %1088 = vst [vmem:[#allocation2 + $0x80] sm:$0xff] %v960
    %1089 = vst [vmem:[#allocation2 + $0x88] sm:$0xff] %v961
    %1090 = vst [vmem:[#allocation2 + $0x90] sm:$0xff] %v962
    %1091 = vst [vmem:[#allocation2 + $0x98] sm:$0xff] %v963
    %1092 = vst [vmem:[#allocation2 + $0xa0] sm:$0xff] %v964
    %1093 = vst [vmem:[#allocation2 + $0xa8] sm:$0xff] %v965
    %1094 = vst [vmem:[#allocation2 + $0xb0] sm:$0xff] %v966
    %1095 = vst [vmem:[#allocation2 + $0xb8] sm:$0xff] %v967
    %1096 = vst [vmem:[#allocation2 + $0xc0] sm:$0xff] %v968
    %1097 = vst [vmem:[#allocation2 + $0xc8] sm:$0xff] %v969
    %1098 = vst [vmem:[#allocation2 + $0xd0] sm:$0xff] %v970
    %1099 = vst [vmem:[#allocation2 + $0xd8] sm:$0xff] %v971
    %1100 = vst [vmem:[#allocation2 + $0xe0] sm:$0xff] %v972
    %1101 = vst [vmem:[#allocation2 + $0xe8] sm:$0xff] %v973
    %1102 = vst [vmem:[#allocation2 + $0xf0] sm:$0xff] %v974
    %1103 = vst [vmem:[#allocation2 + $0xf8] sm:$0xff] %v975
    %1104 = vst [vmem:[#allocation2 + $0x100] sm:$0xff] %v976
    %1105 = vst [vmem:[#allocation2 + $0x108] sm:$0xff] %v977
    %1106 = vst [vmem:[#allocation2 + $0x110] sm:$0xff] %v978
    %1107 = vst [vmem:[#allocation2 + $0x118] sm:$0xff] %v979
    %1108 = vst [vmem:[#allocation2 + $0x120] sm:$0xff] %v980
    %1109 = vst [vmem:[#allocation2 + $0x128] sm:$0xff] %v981
    %1110 = vst [vmem:[#allocation2 + $0x130] sm:$0xff] %v982
    %1111 = vst [vmem:[#allocation2 + $0x138] sm:$0xff] %v983
    %1112 = vst [vmem:[#allocation2 + $0x140] sm:$0xff] %v984
    %1113 = vst [vmem:[#allocation2 + $0x148] sm:$0xff] %v985
    %1114 = vst [vmem:[#allocation2 + $0x150] sm:$0xff] %v986
    %1115 = vst [vmem:[#allocation2 + $0x158] sm:$0xff] %v987
    %1116 = vst [vmem:[#allocation2 + $0x160] sm:$0xff] %v988
    %1117 = vst [vmem:[#allocation2 + $0x168] sm:$0xff] %v989
    %1118 = vst [vmem:[#allocation2 + $0x170] sm:$0xff] %v990
    %1119 = vst [vmem:[#allocation2 + $0x178] sm:$0xff] %v991
    %1120 = vst [vmem:[#allocation2 + $0x180] sm:$0xff] %v992
    %1121 = vst [vmem:[#allocation2 + $0x188] sm:$0xff] %v993
    %1122 = vst [vmem:[#allocation2 + $0x190] sm:$0xff] %v994
    %1123 = vst [vmem:[#allocation2 + $0x198] sm:$0xff] %v995
    %1124 = vst [vmem:[#allocation2 + $0x1a0] sm:$0xff] %v996
    %1125 = vst [vmem:[#allocation2 + $0x1a8] sm:$0xff] %v997
    %1126 = vst [vmem:[#allocation2 + $0x1b0] sm:$0xff] %v998
    %1127 = vst [vmem:[#allocation2 + $0x1b8] sm:$0xff] %v999
    %1128 = vst [vmem:[#allocation2 + $0x1c0] sm:$0xff] %v1000
    %1129 = vst [vmem:[#allocation2 + $0x1c8] sm:$0xff] %v1001
    %1130 = vst [vmem:[#allocation2 + $0x1d0] sm:$0xff] %v1002
    %1131 = vst [vmem:[#allocation2 + $0x1d8] sm:$0xff] %v1003
    %1132 = vst [vmem:[#allocation2 + $0x1e0] sm:$0xff] %v1004
    %1133 = vst [vmem:[#allocation2 + $0x1e8] sm:$0xff] %v1005
    %1134 = vst [vmem:[#allocation2 + $0x1f0] sm:$0xff] %v1006
    %1135 = vst [vmem:[#allocation2 + $0x1f8] sm:$0xff] %v1007
    %1136 = vst [vmem:[#allocation2 + $0x200] sm:$0xff] %v1008
    %1137 = vst [vmem:[#allocation2 + $0x208] sm:$0xff] %v1009
    %1138 = vst [vmem:[#allocation2 + $0x210] sm:$0xff] %v1010
    %1139 = vst [vmem:[#allocation2 + $0x218] sm:$0xff] %v1011
    %1140 = vst [vmem:[#allocation2 + $0x220] sm:$0xff] %v1012
    %1141 = vst [vmem:[#allocation2 + $0x228] sm:$0xff] %v1013
    %1142 = vst [vmem:[#allocation2 + $0x230] sm:$0xff] %v1014
    %1143 = vst [vmem:[#allocation2 + $0x238] sm:$0xff] %v1015
    %1144 = vst [vmem:[#allocation2 + $0x240] sm:$0xff] %v1016
    %1145 = vst [vmem:[#allocation2 + $0x248] sm:$0xff] %v1017
    %1146 = vst [vmem:[#allocation2 + $0x250] sm:$0xff] %v1018
    %1147 = vst [vmem:[#allocation2 + $0x258] sm:$0xff] %v1019
    %1148 = vst [vmem:[#allocation2 + $0x260] sm:$0xff] %v1020
    %1149 = vst [vmem:[#allocation2 + $0x268] sm:$0xff] %v1021
    %1150 = vst [vmem:[#allocation2 + $0x270] sm:$0xff] %v1022
    %1151 = vst [vmem:[#allocation2 + $0x278] sm:$0xff] %v1023
    %1152 = vst [vmem:[#allocation2 + $0x280] sm:$0xff] %v1024
    %1153 = vst [vmem:[#allocation2 + $0x288] sm:$0xff] %v1025
    %1154 = vst [vmem:[#allocation2 + $0x290] sm:$0xff] %v1026
    %1155 = vst [vmem:[#allocation2 + $0x298] sm:$0xff] %v1027
    %1156 = vst [vmem:[#allocation2 + $0x2a0] sm:$0xff] %v1028
    %1157 = vst [vmem:[#allocation2 + $0x2a8] sm:$0xff] %v1029
    %1158 = vst [vmem:[#allocation2 + $0x2b0] sm:$0xff] %v1030
    %1159 = vst [vmem:[#allocation2 + $0x2b8] sm:$0xff] %v1031
    %1160 = vst [vmem:[#allocation2 + $0x2c0] sm:$0xff] %v1032
    %1161 = vst [vmem:[#allocation2 + $0x2c8] sm:$0xff] %v1033
    %1162 = vst [vmem:[#allocation2 + $0x2d0] sm:$0xff] %v1034
    %1163 = vst [vmem:[#allocation2 + $0x2d8] sm:$0xff] %v1035
    %1164 = vst [vmem:[#allocation2 + $0x2e0] sm:$0xff] %v1036
    %1165 = vst [vmem:[#allocation2 + $0x2e8] sm:$0xff] %v1037
    %1166 = vst [vmem:[#allocation2 + $0x2f0] sm:$0xff] %v1038
    %1167 = vst [vmem:[#allocation2 + $0x2f8] sm:$0xff] %v1039
    %1168 = vst [vmem:[#allocation2 + $0x300] sm:$0xff] %v1040
    %1169 = vst [vmem:[#allocation2 + $0x308] sm:$0xff] %v1041
    %1170 = vst [vmem:[#allocation2 + $0x310] sm:$0xff] %v1042
    %1171 = vst [vmem:[#allocation2 + $0x318] sm:$0xff] %v1043
    %1172 = vst [vmem:[#allocation2 + $0x320] sm:$0xff] %v1044
    %1173 = vst [vmem:[#allocation2 + $0x328] sm:$0xff] %v1045
    %1174 = vst [vmem:[#allocation2 + $0x330] sm:$0xff] %v1046
    %1175 = vst [vmem:[#allocation2 + $0x338] sm:$0xff] %v1047
    %1176 = vst [vmem:[#allocation2 + $0x340] sm:$0xff] %v1048
    %1177 = vst [vmem:[#allocation2 + $0x348] sm:$0xff] %v1049
    %1178 = vst [vmem:[#allocation2 + $0x350] sm:$0xff] %v1050
    %1179 = vst [vmem:[#allocation2 + $0x358] sm:$0xff] %v1051
    %1180 = vst [vmem:[#allocation2 + $0x360] sm:$0xff] %v1052
    %1181 = vst [vmem:[#allocation2 + $0x368] sm:$0xff] %v1053
    %1182 = vst [vmem:[#allocation2 + $0x370] sm:$0xff] %v1054
    %1183 = vst [vmem:[#allocation2 + $0x378] sm:$0xff] %v1055
    %1184 = vst [vmem:[#allocation2 + $0x380] sm:$0xff] %v1056
    %1185 = vst [vmem:[#allocation2 + $0x388] sm:$0xff] %v1057
    %1186 = vst [vmem:[#allocation2 + $0x390] sm:$0xff] %v1058
    %1187 = vst [vmem:[#allocation2 + $0x398] sm:$0xff] %v1059
    %1188 = vst [vmem:[#allocation2 + $0x3a0] sm:$0xff] %v1060
    %1189 = vst [vmem:[#allocation2 + $0x3a8] sm:$0xff] %v1061
    %1190 = vst [vmem:[#allocation2 + $0x3b0] sm:$0xff] %v1062
    %1191 = vst [vmem:[#allocation2 + $0x3b8] sm:$0xff] %v1063
    %1192 = vst [vmem:[#allocation2 + $0x3c0] sm:$0xff] %v1064
    %1193 = vst [vmem:[#allocation2 + $0x3c8] sm:$0xff] %v1065
    %1194 = vst [vmem:[#allocation2 + $0x3d0] sm:$0xff] %v1066
    %1195 = vst [vmem:[#allocation2 + $0x3d8] sm:$0xff] %v1067
    %1196 = vst [vmem:[#allocation2 + $0x3e0] sm:$0xff] %v1068
    %1197 = vst [vmem:[#allocation2 + $0x3e8] sm:$0xff] %v1069
    %1198 = vst [vmem:[#allocation2 + $0x3f0] sm:$0xff] %v1070
    %1199 = vst [vmem:[#allocation2 + $0x3f8] sm:$0xff] %v1071
    // Predicated region
    $region26: #{tpu_custom_call.1} parent=1 // pred_check
      %p1200 = pneg %p43
    $region27: #{tpu_custom_call.1} parent=1 // pred_check_branch
      %1202 = sbr.rel (%p1200) target = $region29
    $region28: #{tpu_custom_call.1} parent=1 // pred_region
      %v1203 = vld [vmem:[#allocation2] sm:$0xff]
      %v1204 = vld [vmem:[#allocation2 + $0x8] sm:$0xff]
      %v1205 = vld [vmem:[#allocation2 + $0x10] sm:$0xff]
      %v1206 = vld [vmem:[#allocation2 + $0x18] sm:$0xff]
      %v1207 = vld [vmem:[#allocation2 + $0x20] sm:$0xff]
      %v1208 = vld [vmem:[#allocation2 + $0x28] sm:$0xff]
      %v1209 = vld [vmem:[#allocation2 + $0x30] sm:$0xff]
      %v1210 = vld [vmem:[#allocation2 + $0x38] sm:$0xff]
      %v1211 = vld [vmem:[#allocation2 + $0x40] sm:$0xff]
      %v1212 = vld [vmem:[#allocation2 + $0x48] sm:$0xff]
      %v1213 = vld [vmem:[#allocation2 + $0x50] sm:$0xff]
      %v1214 = vld [vmem:[#allocation2 + $0x58] sm:$0xff]
      %v1215 = vld [vmem:[#allocation2 + $0x60] sm:$0xff]
      %v1216 = vld [vmem:[#allocation2 + $0x68] sm:$0xff]
      %v1217 = vld [vmem:[#allocation2 + $0x70] sm:$0xff]
      %v1218 = vld [vmem:[#allocation2 + $0x78] sm:$0xff]
      %v1219 = vld [vmem:[#allocation2 + $0x80] sm:$0xff]
      %v1220 = vld [vmem:[#allocation2 + $0x88] sm:$0xff]
      %v1221 = vld [vmem:[#allocation2 + $0x90] sm:$0xff]
      %v1222 = vld [vmem:[#allocation2 + $0x98] sm:$0xff]
      %v1223 = vld [vmem:[#allocation2 + $0xa0] sm:$0xff]
      %v1224 = vld [vmem:[#allocation2 + $0xa8] sm:$0xff]
      %v1225 = vld [vmem:[#allocation2 + $0xb0] sm:$0xff]
      %v1226 = vld [vmem:[#allocation2 + $0xb8] sm:$0xff]
      %v1227 = vld [vmem:[#allocation2 + $0xc0] sm:$0xff]
      %v1228 = vld [vmem:[#allocation2 + $0xc8] sm:$0xff]
      %v1229 = vld [vmem:[#allocation2 + $0xd0] sm:$0xff]
      %v1230 = vld [vmem:[#allocation2 + $0xd8] sm:$0xff]
      %v1231 = vld [vmem:[#allocation2 + $0xe0] sm:$0xff]
      %v1232 = vld [vmem:[#allocation2 + $0xe8] sm:$0xff]
      %v1233 = vld [vmem:[#allocation2 + $0xf0] sm:$0xff]
      %v1234 = vld [vmem:[#allocation2 + $0xf8] sm:$0xff]
      %v1235 = vld [vmem:[#allocation2 + $0x100] sm:$0xff]
      %v1236 = vld [vmem:[#allocation2 + $0x108] sm:$0xff]
      %v1237 = vld [vmem:[#allocation2 + $0x110] sm:$0xff]
      %v1238 = vld [vmem:[#allocation2 + $0x118] sm:$0xff]
      %v1239 = vld [vmem:[#allocation2 + $0x120] sm:$0xff]
      %v1240 = vld [vmem:[#allocation2 + $0x128] sm:$0xff]
      %v1241 = vld [vmem:[#allocation2 + $0x130] sm:$0xff]
      %v1242 = vld [vmem:[#allocation2 + $0x138] sm:$0xff]
      %v1243 = vld [vmem:[#allocation2 + $0x140] sm:$0xff]
      %v1244 = vld [vmem:[#allocation2 + $0x148] sm:$0xff]
      %v1245 = vld [vmem:[#allocation2 + $0x150] sm:$0xff]
      %v1246 = vld [vmem:[#allocation2 + $0x158] sm:$0xff]
      %v1247 = vld [vmem:[#allocation2 + $0x160] sm:$0xff]
      %v1248 = vld [vmem:[#allocation2 + $0x168] sm:$0xff]
      %v1249 = vld [vmem:[#allocation2 + $0x170] sm:$0xff]
      %v1250 = vld [vmem:[#allocation2 + $0x178] sm:$0xff]
      %v1251 = vld [vmem:[#allocation2 + $0x180] sm:$0xff]
      %v1252 = vld [vmem:[#allocation2 + $0x188] sm:$0xff]
      %v1253 = vld [vmem:[#allocation2 + $0x190] sm:$0xff]
      %v1254 = vld [vmem:[#allocation2 + $0x198] sm:$0xff]
      %v1255 = vld [vmem:[#allocation2 + $0x1a0] sm:$0xff]
      %v1256 = vld [vmem:[#allocation2 + $0x1a8] sm:$0xff]
      %v1257 = vld [vmem:[#allocation2 + $0x1b0] sm:$0xff]
      %v1258 = vld [vmem:[#allocation2 + $0x1b8] sm:$0xff]
      %v1259 = vld [vmem:[#allocation2 + $0x1c0] sm:$0xff]
      %v1260 = vld [vmem:[#allocation2 + $0x1c8] sm:$0xff]
      %v1261 = vld [vmem:[#allocation2 + $0x1d0] sm:$0xff]
      %v1262 = vld [vmem:[#allocation2 + $0x1d8] sm:$0xff]
      %v1263 = vld [vmem:[#allocation2 + $0x1e0] sm:$0xff]
      %v1264 = vld [vmem:[#allocation2 + $0x1e8] sm:$0xff]
      %v1265 = vld [vmem:[#allocation2 + $0x1f0] sm:$0xff]
      %v1266 = vld [vmem:[#allocation2 + $0x1f8] sm:$0xff]
      %v1267 = vld [vmem:[#allocation2 + $0x200] sm:$0xff]
      %v1268 = vld [vmem:[#allocation2 + $0x208] sm:$0xff]
      %v1269 = vld [vmem:[#allocation2 + $0x210] sm:$0xff]
      %v1270 = vld [vmem:[#allocation2 + $0x218] sm:$0xff]
      %v1271 = vld [vmem:[#allocation2 + $0x220] sm:$0xff]
      %v1272 = vld [vmem:[#allocation2 + $0x228] sm:$0xff]
      %v1273 = vld [vmem:[#allocation2 + $0x230] sm:$0xff]
      %v1274 = vld [vmem:[#allocation2 + $0x238] sm:$0xff]
      %v1275 = vld [vmem:[#allocation2 + $0x240] sm:$0xff]
      %v1276 = vld [vmem:[#allocation2 + $0x248] sm:$0xff]
      %v1277 = vld [vmem:[#allocation2 + $0x250] sm:$0xff]
      %v1278 = vld [vmem:[#allocation2 + $0x258] sm:$0xff]
      %v1279 = vld [vmem:[#allocation2 + $0x260] sm:$0xff]
      %v1280 = vld [vmem:[#allocation2 + $0x268] sm:$0xff]
      %v1281 = vld [vmem:[#allocation2 + $0x270] sm:$0xff]
      %v1282 = vld [vmem:[#allocation2 + $0x278] sm:$0xff]
      %v1283 = vld [vmem:[#allocation2 + $0x280] sm:$0xff]
      %v1284 = vld [vmem:[#allocation2 + $0x288] sm:$0xff]
      %v1285 = vld [vmem:[#allocation2 + $0x290] sm:$0xff]
      %v1286 = vld [vmem:[#allocation2 + $0x298] sm:$0xff]
      %v1287 = vld [vmem:[#allocation2 + $0x2a0] sm:$0xff]
      %v1288 = vld [vmem:[#allocation2 + $0x2a8] sm:$0xff]
      %v1289 = vld [vmem:[#allocation2 + $0x2b0] sm:$0xff]
      %v1290 = vld [vmem:[#allocation2 + $0x2b8] sm:$0xff]
      %v1291 = vld [vmem:[#allocation2 + $0x2c0] sm:$0xff]
      %v1292 = vld [vmem:[#allocation2 + $0x2c8] sm:$0xff]
      %v1293 = vld [vmem:[#allocation2 + $0x2d0] sm:$0xff]
      %v1294 = vld [vmem:[#allocation2 + $0x2d8] sm:$0xff]
      %v1295 = vld [vmem:[#allocation2 + $0x2e0] sm:$0xff]
      %v1296 = vld [vmem:[#allocation2 + $0x2e8] sm:$0xff]
      %v1297 = vld [vmem:[#allocation2 + $0x2f0] sm:$0xff]
      %v1298 = vld [vmem:[#allocation2 + $0x2f8] sm:$0xff]
      %v1299 = vld [vmem:[#allocation2 + $0x300] sm:$0xff]
      %v1300 = vld [vmem:[#allocation2 + $0x308] sm:$0xff]
      %v1301 = vld [vmem:[#allocation2 + $0x310] sm:$0xff]
      %v1302 = vld [vmem:[#allocation2 + $0x318] sm:$0xff]
      %v1303 = vld [vmem:[#allocation2 + $0x320] sm:$0xff]
      %v1304 = vld [vmem:[#allocation2 + $0x328] sm:$0xff]
      %v1305 = vld [vmem:[#allocation2 + $0x330] sm:$0xff]
      %v1306 = vld [vmem:[#allocation2 + $0x338] sm:$0xff]
      %v1307 = vld [vmem:[#allocation2 + $0x340] sm:$0xff]
      %v1308 = vld [vmem:[#allocation2 + $0x348] sm:$0xff]
      %v1309 = vld [vmem:[#allocation2 + $0x350] sm:$0xff]
      %v1310 = vld [vmem:[#allocation2 + $0x358] sm:$0xff]
      %v1311 = vld [vmem:[#allocation2 + $0x360] sm:$0xff]
      %v1312 = vld [vmem:[#allocation2 + $0x368] sm:$0xff]
      %v1313 = vld [vmem:[#allocation2 + $0x370] sm:$0xff]
      %v1314 = vld [vmem:[#allocation2 + $0x378] sm:$0xff]
      %v1315 = vld [vmem:[#allocation2 + $0x380] sm:$0xff]
      %v1316 = vld [vmem:[#allocation2 + $0x388] sm:$0xff]
      %v1317 = vld [vmem:[#allocation2 + $0x390] sm:$0xff]
      %v1318 = vld [vmem:[#allocation2 + $0x398] sm:$0xff]
      %v1319 = vld [vmem:[#allocation2 + $0x3a0] sm:$0xff]
      %v1320 = vld [vmem:[#allocation2 + $0x3a8] sm:$0xff]
      %v1321 = vld [vmem:[#allocation2 + $0x3b0] sm:$0xff]
      %v1322 = vld [vmem:[#allocation2 + $0x3b8] sm:$0xff]
      %v1323 = vld [vmem:[#allocation2 + $0x3c0] sm:$0xff]
      %v1324 = vld [vmem:[#allocation2 + $0x3c8] sm:$0xff]
      %v1325 = vld [vmem:[#allocation2 + $0x3d0] sm:$0xff]
      %v1326 = vld [vmem:[#allocation2 + $0x3d8] sm:$0xff]
      %v1327 = vld [vmem:[#allocation2 + $0x3e0] sm:$0xff]
      %v1328 = vld [vmem:[#allocation2 + $0x3e8] sm:$0xff]
      %v1329 = vld [vmem:[#allocation2 + $0x3f0] sm:$0xff]
      %v1330 = vld [vmem:[#allocation2 + $0x3f8] sm:$0xff]
      %v1331 = vld [vmem:[%s2] sm:$0x3]
      %v1333 = vlaneseq
      %v1334 = vshrl.u32 %v1333, 7
      %v1335 = vsub.s32 0, %v1334
      %v1336 = vrot.slane %v1331, %v1335
      %v1337 = vlaneseq
      %v1338 = vshrl.u32 %v1337, 7
      %v1339 = vsub.s32 1, %v1338
      %v1340 = vrot.slane %v1331, %v1339
      %v1343 = vadd.f32 %v1203, %v1336
      %v1344 = vadd.f32 %v1204, %v1340
      %v1345 = vadd.f32 %v1205, %v1336
      %v1346 = vadd.f32 %v1206, %v1340
      %v1347 = vadd.f32 %v1207, %v1336
      %v1348 = vadd.f32 %v1208, %v1340
      %v1349 = vadd.f32 %v1209, %v1336
      %v1350 = vadd.f32 %v1210, %v1340
      %v1351 = vadd.f32 %v1211, %v1336
      %v1352 = vadd.f32 %v1212, %v1340
      %v1353 = vadd.f32 %v1213, %v1336
      %v1354 = vadd.f32 %v1214, %v1340
      %v1355 = vadd.f32 %v1215, %v1336
      %v1356 = vadd.f32 %v1216, %v1340
      %v1357 = vadd.f32 %v1217, %v1336
      %v1358 = vadd.f32 %v1218, %v1340
      %v1359 = vadd.f32 %v1219, %v1336
      %v1360 = vadd.f32 %v1220, %v1340
      %v1361 = vadd.f32 %v1221, %v1336
      %v1362 = vadd.f32 %v1222, %v1340
      %v1363 = vadd.f32 %v1223, %v1336
      %v1364 = vadd.f32 %v1224, %v1340
      %v1365 = vadd.f32 %v1225, %v1336
      %v1366 = vadd.f32 %v1226, %v1340
      %v1367 = vadd.f32 %v1227, %v1336
      %v1368 = vadd.f32 %v1228, %v1340
      %v1369 = vadd.f32 %v1229, %v1336
      %v1370 = vadd.f32 %v1230, %v1340
      %v1371 = vadd.f32 %v1231, %v1336
      %v1372 = vadd.f32 %v1232, %v1340
      %v1373 = vadd.f32 %v1233, %v1336
      %v1374 = vadd.f32 %v1234, %v1340
      %v1375 = vadd.f32 %v1235, %v1336
      %v1376 = vadd.f32 %v1236, %v1340
      %v1377 = vadd.f32 %v1237, %v1336
      %v1378 = vadd.f32 %v1238, %v1340
      %v1379 = vadd.f32 %v1239, %v1336
      %v1380 = vadd.f32 %v1240, %v1340
      %v1381 = vadd.f32 %v1241, %v1336
      %v1382 = vadd.f32 %v1242, %v1340
      %v1383 = vadd.f32 %v1243, %v1336
      %v1384 = vadd.f32 %v1244, %v1340
      %v1385 = vadd.f32 %v1245, %v1336
      %v1386 = vadd.f32 %v1246, %v1340
      %v1387 = vadd.f32 %v1247, %v1336
      %v1388 = vadd.f32 %v1248, %v1340
      %v1389 = vadd.f32 %v1249, %v1336
      %v1390 = vadd.f32 %v1250, %v1340
      %v1391 = vadd.f32 %v1251, %v1336
      %v1392 = vadd.f32 %v1252, %v1340
      %v1393 = vadd.f32 %v1253, %v1336
      %v1394 = vadd.f32 %v1254, %v1340
      %v1395 = vadd.f32 %v1255, %v1336
      %v1396 = vadd.f32 %v1256, %v1340
      %v1397 = vadd.f32 %v1257, %v1336
      %v1398 = vadd.f32 %v1258, %v1340
      %v1399 = vadd.f32 %v1259, %v1336
      %v1400 = vadd.f32 %v1260, %v1340
      %v1401 = vadd.f32 %v1261, %v1336
      %v1402 = vadd.f32 %v1262, %v1340
      %v1403 = vadd.f32 %v1263, %v1336
      %v1404 = vadd.f32 %v1264, %v1340
      %v1405 = vadd.f32 %v1265, %v1336
      %v1406 = vadd.f32 %v1266, %v1340
      %v1407 = vadd.f32 %v1267, %v1336
      %v1408 = vadd.f32 %v1268, %v1340
      %v1409 = vadd.f32 %v1269, %v1336
      %v1410 = vadd.f32 %v1270, %v1340
      %v1411 = vadd.f32 %v1271, %v1336
      %v1412 = vadd.f32 %v1272, %v1340
      %v1413 = vadd.f32 %v1273, %v1336
      %v1414 = vadd.f32 %v1274, %v1340
      %v1415 = vadd.f32 %v1275, %v1336
      %v1416 = vadd.f32 %v1276, %v1340
      %v1417 = vadd.f32 %v1277, %v1336
      %v1418 = vadd.f32 %v1278, %v1340
      %v1419 = vadd.f32 %v1279, %v1336
      %v1420 = vadd.f32 %v1280, %v1340
      %v1421 = vadd.f32 %v1281, %v1336
      %v1422 = vadd.f32 %v1282, %v1340
      %v1423 = vadd.f32 %v1283, %v1336
      %v1424 = vadd.f32 %v1284, %v1340
      %v1425 = vadd.f32 %v1285, %v1336
      %v1426 = vadd.f32 %v1286, %v1340
      %v1427 = vadd.f32 %v1287, %v1336
      %v1428 = vadd.f32 %v1288, %v1340
      %v1429 = vadd.f32 %v1289, %v1336
      %v1430 = vadd.f32 %v1290, %v1340
      %v1431 = vadd.f32 %v1291, %v1336
      %v1432 = vadd.f32 %v1292, %v1340
      %v1433 = vadd.f32 %v1293, %v1336
      %v1434 = vadd.f32 %v1294, %v1340
      %v1435 = vadd.f32 %v1295, %v1336
      %v1436 = vadd.f32 %v1296, %v1340
      %v1437 = vadd.f32 %v1297, %v1336
      %v1438 = vadd.f32 %v1298, %v1340
      %v1439 = vadd.f32 %v1299, %v1336
      %v1440 = vadd.f32 %v1300, %v1340
      %v1441 = vadd.f32 %v1301, %v1336
      %v1442 = vadd.f32 %v1302, %v1340
      %v1443 = vadd.f32 %v1303, %v1336
      %v1444 = vadd.f32 %v1304, %v1340
      %v1445 = vadd.f32 %v1305, %v1336
      %v1446 = vadd.f32 %v1306, %v1340
      %v1447 = vadd.f32 %v1307, %v1336
      %v1448 = vadd.f32 %v1308, %v1340
      %v1449 = vadd.f32 %v1309, %v1336
      %v1450 = vadd.f32 %v1310, %v1340
      %v1451 = vadd.f32 %v1311, %v1336
      %v1452 = vadd.f32 %v1312, %v1340
      %v1453 = vadd.f32 %v1313, %v1336
      %v1454 = vadd.f32 %v1314, %v1340
      %v1455 = vadd.f32 %v1315, %v1336
      %v1456 = vadd.f32 %v1316, %v1340
      %v1457 = vadd.f32 %v1317, %v1336
      %v1458 = vadd.f32 %v1318, %v1340
      %v1459 = vadd.f32 %v1319, %v1336
      %v1460 = vadd.f32 %v1320, %v1340
      %v1461 = vadd.f32 %v1321, %v1336
      %v1462 = vadd.f32 %v1322, %v1340
      %v1463 = vadd.f32 %v1323, %v1336
      %v1464 = vadd.f32 %v1324, %v1340
      %v1465 = vadd.f32 %v1325, %v1336
      %v1466 = vadd.f32 %v1326, %v1340
      %v1467 = vadd.f32 %v1327, %v1336
      %v1468 = vadd.f32 %v1328, %v1340
      %v1469 = vadd.f32 %v1329, %v1336
      %v1470 = vadd.f32 %v1330, %v1340
      %1471 = vst [vmem:[#allocation8] sm:$0xff] %v1343
      %1472 = vst [vmem:[#allocation8 + $0x8] sm:$0xff] %v1344
      %1473 = vst [vmem:[#allocation8 + $0x10] sm:$0xff] %v1345
      %1474 = vst [vmem:[#allocation8 + $0x18] sm:$0xff] %v1346
      %1475 = vst [vmem:[#allocation8 + $0x20] sm:$0xff] %v1347
      %1476 = vst [vmem:[#allocation8 + $0x28] sm:$0xff] %v1348
      %1477 = vst [vmem:[#allocation8 + $0x30] sm:$0xff] %v1349
      %1478 = vst [vmem:[#allocation8 + $0x38] sm:$0xff] %v1350
      %1479 = vst [vmem:[#allocation8 + $0x40] sm:$0xff] %v1351
      %1480 = vst [vmem:[#allocation8 + $0x48] sm:$0xff] %v1352
      %1481 = vst [vmem:[#allocation8 + $0x50] sm:$0xff] %v1353
      %1482 = vst [vmem:[#allocation8 + $0x58] sm:$0xff] %v1354
      %1483 = vst [vmem:[#allocation8 + $0x60] sm:$0xff] %v1355
      %1484 = vst [vmem:[#allocation8 + $0x68] sm:$0xff] %v1356
      %1485 = vst [vmem:[#allocation8 + $0x70] sm:$0xff] %v1357
      %1486 = vst [vmem:[#allocation8 + $0x78] sm:$0xff] %v1358
      %1487 = vst [vmem:[#allocation8 + $0x80] sm:$0xff] %v1359
      %1488 = vst [vmem:[#allocation8 + $0x88] sm:$0xff] %v1360
      %1489 = vst [vmem:[#allocation8 + $0x90] sm:$0xff] %v1361
      %1490 = vst [vmem:[#allocation8 + $0x98] sm:$0xff] %v1362
      %1491 = vst [vmem:[#allocation8 + $0xa0] sm:$0xff] %v1363
      %1492 = vst [vmem:[#allocation8 + $0xa8] sm:$0xff] %v1364
      %1493 = vst [vmem:[#allocation8 + $0xb0] sm:$0xff] %v1365
      %1494 = vst [vmem:[#allocation8 + $0xb8] sm:$0xff] %v1366
      %1495 = vst [vmem:[#allocation8 + $0xc0] sm:$0xff] %v1367
      %1496 = vst [vmem:[#allocation8 + $0xc8] sm:$0xff] %v1368
      %1497 = vst [vmem:[#allocation8 + $0xd0] sm:$0xff] %v1369
      %1498 = vst [vmem:[#allocation8 + $0xd8] sm:$0xff] %v1370
      %1499 = vst [vmem:[#allocation8 + $0xe0] sm:$0xff] %v1371
      %1500 = vst [vmem:[#allocation8 + $0xe8] sm:$0xff] %v1372
      %1501 = vst [vmem:[#allocation8 + $0xf0] sm:$0xff] %v1373
      %1502 = vst [vmem:[#allocation8 + $0xf8] sm:$0xff] %v1374
      %1503 = vst [vmem:[#allocation8 + $0x100] sm:$0xff] %v1375
      %1504 = vst [vmem:[#allocation8 + $0x108] sm:$0xff] %v1376
      %1505 = vst [vmem:[#allocation8 + $0x110] sm:$0xff] %v1377
      %1506 = vst [vmem:[#allocation8 + $0x118] sm:$0xff] %v1378
      %1507 = vst [vmem:[#allocation8 + $0x120] sm:$0xff] %v1379
      %1508 = vst [vmem:[#allocation8 + $0x128] sm:$0xff] %v1380
      %1509 = vst [vmem:[#allocation8 + $0x130] sm:$0xff] %v1381
      %1510 = vst [vmem:[#allocation8 + $0x138] sm:$0xff] %v1382
      %1511 = vst [vmem:[#allocation8 + $0x140] sm:$0xff] %v1383
      %1512 = vst [vmem:[#allocation8 + $0x148] sm:$0xff] %v1384
      %1513 = vst [vmem:[#allocation8 + $0x150] sm:$0xff] %v1385
      %1514 = vst [vmem:[#allocation8 + $0x158] sm:$0xff] %v1386
      %1515 = vst [vmem:[#allocation8 + $0x160] sm:$0xff] %v1387
      %1516 = vst [vmem:[#allocation8 + $0x168] sm:$0xff] %v1388
      %1517 = vst [vmem:[#allocation8 + $0x170] sm:$0xff] %v1389
      %1518 = vst [vmem:[#allocation8 + $0x178] sm:$0xff] %v1390
      %1519 = vst [vmem:[#allocation8 + $0x180] sm:$0xff] %v1391
      %1520 = vst [vmem:[#allocation8 + $0x188] sm:$0xff] %v1392
      %1521 = vst [vmem:[#allocation8 + $0x190] sm:$0xff] %v1393
      %1522 = vst [vmem:[#allocation8 + $0x198] sm:$0xff] %v1394
      %1523 = vst [vmem:[#allocation8 + $0x1a0] sm:$0xff] %v1395
      %1524 = vst [vmem:[#allocation8 + $0x1a8] sm:$0xff] %v1396
      %1525 = vst [vmem:[#allocation8 + $0x1b0] sm:$0xff] %v1397
      %1526 = vst [vmem:[#allocation8 + $0x1b8] sm:$0xff] %v1398
      %1527 = vst [vmem:[#allocation8 + $0x1c0] sm:$0xff] %v1399
      %1528 = vst [vmem:[#allocation8 + $0x1c8] sm:$0xff] %v1400
      %1529 = vst [vmem:[#allocation8 + $0x1d0] sm:$0xff] %v1401
      %1530 = vst [vmem:[#allocation8 + $0x1d8] sm:$0xff] %v1402
      %1531 = vst [vmem:[#allocation8 + $0x1e0] sm:$0xff] %v1403
      %1532 = vst [vmem:[#allocation8 + $0x1e8] sm:$0xff] %v1404
      %1533 = vst [vmem:[#allocation8 + $0x1f0] sm:$0xff] %v1405
      %1534 = vst [vmem:[#allocation8 + $0x1f8] sm:$0xff] %v1406
      %1535 = vst [vmem:[#allocation8 + $0x200] sm:$0xff] %v1407
      %1536 = vst [vmem:[#allocation8 + $0x208] sm:$0xff] %v1408
      %1537 = vst [vmem:[#allocation8 + $0x210] sm:$0xff] %v1409
      %1538 = vst [vmem:[#allocation8 + $0x218] sm:$0xff] %v1410
      %1539 = vst [vmem:[#allocation8 + $0x220] sm:$0xff] %v1411
      %1540 = vst [vmem:[#allocation8 + $0x228] sm:$0xff] %v1412
      %1541 = vst [vmem:[#allocation8 + $0x230] sm:$0xff] %v1413
      %1542 = vst [vmem:[#allocation8 + $0x238] sm:$0xff] %v1414
      %1543 = vst [vmem:[#allocation8 + $0x240] sm:$0xff] %v1415
      %1544 = vst [vmem:[#allocation8 + $0x248] sm:$0xff] %v1416
      %1545 = vst [vmem:[#allocation8 + $0x250] sm:$0xff] %v1417
      %1546 = vst [vmem:[#allocation8 + $0x258] sm:$0xff] %v1418
      %1547 = vst [vmem:[#allocation8 + $0x260] sm:$0xff] %v1419
      %1548 = vst [vmem:[#allocation8 + $0x268] sm:$0xff] %v1420
      %1549 = vst [vmem:[#allocation8 + $0x270] sm:$0xff] %v1421
      %1550 = vst [vmem:[#allocation8 + $0x278] sm:$0xff] %v1422
      %1551 = vst [vmem:[#allocation8 + $0x280] sm:$0xff] %v1423
      %1552 = vst [vmem:[#allocation8 + $0x288] sm:$0xff] %v1424
      %1553 = vst [vmem:[#allocation8 + $0x290] sm:$0xff] %v1425
      %1554 = vst [vmem:[#allocation8 + $0x298] sm:$0xff] %v1426
      %1555 = vst [vmem:[#allocation8 + $0x2a0] sm:$0xff] %v1427
      %1556 = vst [vmem:[#allocation8 + $0x2a8] sm:$0xff] %v1428
      %1557 = vst [vmem:[#allocation8 + $0x2b0] sm:$0xff] %v1429
      %1558 = vst [vmem:[#allocation8 + $0x2b8] sm:$0xff] %v1430
      %1559 = vst [vmem:[#allocation8 + $0x2c0] sm:$0xff] %v1431
      %1560 = vst [vmem:[#allocation8 + $0x2c8] sm:$0xff] %v1432
      %1561 = vst [vmem:[#allocation8 + $0x2d0] sm:$0xff] %v1433
      %1562 = vst [vmem:[#allocation8 + $0x2d8] sm:$0xff] %v1434
      %1563 = vst [vmem:[#allocation8 + $0x2e0] sm:$0xff] %v1435
      %1564 = vst [vmem:[#allocation8 + $0x2e8] sm:$0xff] %v1436
      %1565 = vst [vmem:[#allocation8 + $0x2f0] sm:$0xff] %v1437
      %1566 = vst [vmem:[#allocation8 + $0x2f8] sm:$0xff] %v1438
      %1567 = vst [vmem:[#allocation8 + $0x300] sm:$0xff] %v1439
      %1568 = vst [vmem:[#allocation8 + $0x308] sm:$0xff] %v1440
      %1569 = vst [vmem:[#allocation8 + $0x310] sm:$0xff] %v1441
      %1570 = vst [vmem:[#allocation8 + $0x318] sm:$0xff] %v1442
      %1571 = vst [vmem:[#allocation8 + $0x320] sm:$0xff] %v1443
      %1572 = vst [vmem:[#allocation8 + $0x328] sm:$0xff] %v1444
      %1573 = vst [vmem:[#allocation8 + $0x330] sm:$0xff] %v1445
      %1574 = vst [vmem:[#allocation8 + $0x338] sm:$0xff] %v1446
      %1575 = vst [vmem:[#allocation8 + $0x340] sm:$0xff] %v1447
      %1576 = vst [vmem:[#allocation8 + $0x348] sm:$0xff] %v1448
      %1577 = vst [vmem:[#allocation8 + $0x350] sm:$0xff] %v1449
      %1578 = vst [vmem:[#allocation8 + $0x358] sm:$0xff] %v1450
      %1579 = vst [vmem:[#allocation8 + $0x360] sm:$0xff] %v1451
      %1580 = vst [vmem:[#allocation8 + $0x368] sm:$0xff] %v1452
      %1581 = vst [vmem:[#allocation8 + $0x370] sm:$0xff] %v1453
      %1582 = vst [vmem:[#allocation8 + $0x378] sm:$0xff] %v1454
      %1583 = vst [vmem:[#allocation8 + $0x380] sm:$0xff] %v1455
      %1584 = vst [vmem:[#allocation8 + $0x388] sm:$0xff] %v1456
      %1585 = vst [vmem:[#allocation8 + $0x390] sm:$0xff] %v1457
      %1586 = vst [vmem:[#allocation8 + $0x398] sm:$0xff] %v1458
      %1587 = vst [vmem:[#allocation8 + $0x3a0] sm:$0xff] %v1459
      %1588 = vst [vmem:[#allocation8 + $0x3a8] sm:$0xff] %v1460
      %1589 = vst [vmem:[#allocation8 + $0x3b0] sm:$0xff] %v1461
      %1590 = vst [vmem:[#allocation8 + $0x3b8] sm:$0xff] %v1462
      %1591 = vst [vmem:[#allocation8 + $0x3c0] sm:$0xff] %v1463
      %1592 = vst [vmem:[#allocation8 + $0x3c8] sm:$0xff] %v1464
      %1593 = vst [vmem:[#allocation8 + $0x3d0] sm:$0xff] %v1465
      %1594 = vst [vmem:[#allocation8 + $0x3d8] sm:$0xff] %v1466
      %1595 = vst [vmem:[#allocation8 + $0x3e0] sm:$0xff] %v1467
      %1596 = vst [vmem:[#allocation8 + $0x3e8] sm:$0xff] %v1468
      %1597 = vst [vmem:[#allocation8 + $0x3f0] sm:$0xff] %v1469
      %1598 = vst [vmem:[#allocation8 + $0x3f8] sm:$0xff] %v1470
    $region29: #{tpu_custom_call.1} parent=1 // pred_fallthru
      _
    // Predicated region
    $region30: #{tpu_custom_call.1} parent=1 // pred_check
      _
    $region31: #{tpu_custom_call.1} parent=1 // pred_check_branch
      %1600 = sbr.rel (0) target = $region33
    $region32: #{tpu_custom_call.1} parent=1 // pred_region
      %s1602 = ssub.s32 16384, 16384
      %1603 = vsyncadd [#allocation5], %s1602
      %s1604 = sshll.u32 [#allocation8], 4
      %s1605 = int_to_ptr.vmem [resolvable:$true] %s1604
      %1610 = dma.vmem_to_hbm [thread:$0]  %s1605, 16384, %s3, [#allocation5], 256, 256, 16
    $region33: #{tpu_custom_call.1} parent=1 // pred_fallthru
      _
    // Predicated region
    $region34: #{tpu_custom_call.1} parent=1 // pred_check
      _
    $region35: #{tpu_custom_call.1} parent=1 // pred_check_branch
      %1612 = sbr.rel (0) target = $region37
    $region36: #{tpu_custom_call.1} parent=1 // pred_region
      %1613 = dma.done [#allocation5], 16384
    $region37: #{tpu_custom_call.1} parent=1 // pred_fallthru
      _
    %1614 = vsyncpa [#allocation4], 1
    %1615 = vsyncpa [#allocation7], 1
    %1616 = vsyncpa [#allocation5], 1

</llo_original>
